<compile_context>
chip_gen: v6e
topology: v6e:2x2x1
jax: 0.10.0
libtpu: 0.0.40
codegen_flags: <defaults>
</compile_context>

<pallas_src>
import jax
import jax.numpy as jnp
from jax.experimental import pallas as pl
from jax.experimental.pallas import tpu as pltpu


# ----------------------------- Pallas kernel --------------------------------
def oracle_kernel(x_ref, len_ref, cs_ref,
                  wih_ref, whh_ref, blstm_ref,
                  w1h_ref, w1cs_ref, b1_ref,
                  w2_ref, b2_ref,
                  out_ref):
    B = len_ref.shape[0]
    TB, _ = x_ref.shape
    T = TB // B
    H = whh_ref.shape[0]

    lens = len_ref[...]            # (B, 1) int32
    whh = whh_ref[...]             # (H, 4H)

    # Hoisted input projection: one (T*B, E) x (E, 4H) matmul + bias, instead
    # of T tiny matmuls on the serial chain.
    gates_x = (jnp.dot(x_ref[...], wih_ref[...],
                       preferred_element_type=jnp.float32)
               + blstm_ref[...])                                    # (T*B, 4H)

    # Non-recurrent half of MLP layer 1 (cat_emb ++ spatial), issued before the
    # recurrence so it overlaps with the LSTM loop.
    hid_cs = (jnp.dot(cs_ref[...], w1cs_ref[...],
                      preferred_element_type=jnp.float32)
              + b1_ref[...])                                        # (B, M)

    h = jnp.zeros((B, H), jnp.float32)
    c = jnp.zeros((B, H), jnp.float32)

    # Unrolled LSTM recurrence (T small and static). PyTorch gate order
    # i, f, g, o ; c' = f*c + i*g ; h' = o*tanh(c').
    for t in range(T):
        gates = gates_x[t * B:(t + 1) * B, :] + jnp.dot(
            h, whh, preferred_element_type=jnp.float32)             # (B, 4H)
        # One full-width sigmoid on the whole 128-lane gate vreg; tanh only on
        # the g slice.  i/f/o are lane slices of the sigmoid result.
        sig = jax.nn.sigmoid(gates)
        i_g = sig[:, 0:H]
        f_g = sig[:, H:2 * H]
        o_g = sig[:, 3 * H:4 * H]
        g_g = jnp.tanh(gates[:, 2 * H:3 * H])
        c_new = f_g * c + i_g * g_g
        h_new = o_g * jnp.tanh(c_new)
        # Freeze state for finished sequences (packed-sequence semantics).
        mask = lens > t                                             # (B, 1) bool
        h = jnp.where(mask, h_new, h)
        c = jnp.where(mask, c_new, c)

    # Tail of the MLP: only the h-dependent matmul remains after the loop.
    hid = jnp.maximum(
        hid_cs + jnp.dot(h, w1h_ref[...], preferred_element_type=jnp.float32),
        0.0)                                                        # ReLU
    out_ref[...] = (jnp.dot(hid, w2_ref[...],
                            preferred_element_type=jnp.float32)
                    + b2_ref[...])                                  # (B, 128)


# ------------------------------ Wrapper --------------------------------------
@jax.jit
def oracle_forward(params, question, length, target_category, target_spatial):
    B, T = question.shape

    # Glue: embedding gathers (padding rows already zeroed in the tables).
    x_emb = jnp.take(params["word_emb"], question, axis=0)           # (B, T, E)
    # Time-major flattened layout so the per-step slice inside the kernel is a
    # contiguous sublane block at rows [t*B, (t+1)*B).
    x_tb = jnp.transpose(x_emb, (1, 0, 2)).reshape(T * B, -1)        # (T*B, E)
    cat_emb = jnp.take(params["cat_emb"], target_category, axis=0)   # (B, C)
    catspat = jnp.concatenate([cat_emb, target_spatial], axis=-1)    # (B, C+S)
    lens = length.astype(jnp.int32).reshape(B, 1)                    # (B, 1)

    H = params["whh"].shape[0]
    # Split W1 rows to match concat order [hidden | cat_emb ++ spatial].
    w1 = params["w1"]
    w1h, w1cs = w1[:H], w1[H:]

    # Lane-dense output: pad the last linear to 128 output lanes (zeros), so
    # the final store is an unmasked vst; slice the 3 real logits afterwards.
    M = w1.shape[1]
    OUT = params["w2"].shape[1]
    OUT_PAD = 128
    w2p = jnp.zeros((M, OUT_PAD), jnp.float32).at[:, :OUT].set(params["w2"])
    b2p = jnp.zeros((1, OUT_PAD), jnp.float32).at[:, :OUT].set(params["b2"])

    vmem = pl.BlockSpec(memory_space=pltpu.MemorySpace.VMEM)
    inputs = (x_tb, lens, catspat,
              params["wih"], params["whh"], params["b_lstm"],
              w1h, w1cs, params["b1"],
              w2p, b2p)

    out = pl.pallas_call(
        oracle_kernel,
        out_shape=jax.ShapeDtypeStruct((B, OUT_PAD), jnp.float32),
        in_specs=[vmem] * len(inputs),
        out_specs=vmem,
    )(*inputs)
    return out[:, :OUT]


# --------------------------- Pure-JAX reference -------------------------------
def oracle_reference(params, question, length, target_category, target_spatial):
    B, T = question.shape
    H = params["whh"].shape[0]
    x_emb = jnp.take(params["word_emb"], question, axis=0)
    cat_emb = jnp.take(params["cat_emb"], target_category, axis=0)
    lens = length.astype(jnp.int32).reshape(B, 1)

    h = jnp.zeros((B, H), jnp.float32)
    c = jnp.zeros((B, H), jnp.float32)
    for t in range(T):
        gates = x_emb[:, t, :] @ params["wih"] + h @ params["whh"] + params["b_lstm"]
        i_g = jax.nn.sigmoid(gates[:, 0:H])
        f_g = jax.nn.sigmoid(gates[:, H:2 * H])
        g_g = jnp.tanh(gates[:, 2 * H:3 * H])
        o_g = jax.nn.sigmoid(gates[:, 3 * H:4 * H])
        c_new = f_g * c + i_g * g_g
        h_new = o_g * jnp.tanh(c_new)
        mask = (lens > t).astype(jnp.float32)
        h = mask * h_new + (1.0 - mask) * h
        c = mask * c_new + (1.0 - mask) * c

    mlp_in = jnp.concatenate([h, cat_emb, target_spatial], axis=-1)
    hid = jnp.maximum(mlp_in @ params["w1"] + params["b1"], 0.0)
    return hid @ params["w2"] + params["b2"]


# ------------------------------- Main -----------------------------------------
if __name__ == "__main__":
    # Small, module-consistent hyperparameters.
    NUM_WORDS = 20          # num_word_embeddings
    E = 32                  # word_embedding_dim
    H = 32                  # hidden_size (4H = 128 -> full lane width)
    NUM_CATS = 10           # num_cat_embeddings
    C = 16                  # cat_embedding_dim
    M = 64                  # mlp_hidden
    S = 8                   # num_spatial
    B, T = 8, 8             # batch, max sequence length

    key = jax.random.PRNGKey(0)
    ks = jax.random.split(key, 12)

    def init(k, shape, scale=0.1):
        return (scale * jax.random.normal(k, shape)).astype(jnp.float32)

    # Embedding tables (padding_idx=0 rows zeroed).
    word_emb = init(ks[0], (NUM_WORDS, E)).at[0].set(0.0)
    cat_emb = init(ks[1], (NUM_CATS, C)).at[0].set(0.0)

    # LSTM weights, PyTorch gate order (i, f, g, o), stored transposed.
    wih = init(ks[2], (E, 4 * H))
    whh = init(ks[3], (H, 4 * H))
    b_lstm = (init(ks[4], (1, 4 * H)) + init(ks[5], (1, 4 * H)))  # b_ih + b_hh

    # MLP weights (stored transposed: (in, out)).
    w1 = init(ks[6], (H + C + S, M))
    b1 = init(ks[7], (1, M))
    w2 = init(ks[8], (M, 3))
    b2 = init(ks[9], (1, 3))

    params = dict(word_emb=word_emb, cat_emb=cat_emb,
                  wih=wih, whh=whh, b_lstm=b_lstm,
                  w1=w1, b1=b1, w2=w2, b2=b2)

    # Deterministic example inputs.
    length = 1 + (jax.random.randint(ks[10], (B,), 0, T)).astype(jnp.int32)   # in [1, T]
    question = jax.random.randint(ks[11], (B, T), 1, NUM_WORDS).astype(jnp.int32)
    # Zero-pad past each sequence's length (padding token = 0), like real data.
    pos = jnp.arange(T)[None, :]
    question = jnp.where(pos < length[:, None], question, 0)
    target_category = jax.random.randint(jax.random.PRNGKey(42), (B,), 1, NUM_CATS).astype(jnp.int32)
    target_spatial = (0.5 * jax.random.normal(jax.random.PRNGKey(7), (B, S))).astype(jnp.float32)

    logits = oracle_forward(params, question, length, target_category, target_spatial)
    logits = jax.block_until_ready(logits)

    ref = oracle_reference(params, question, length, target_category, target_spatial)
    assert logits.shape == (B, 3)
    assert jnp.allclose(logits, ref, rtol=1e-5, atol=1e-5), "mismatch vs JAX reference"

    print("KERNEL_OK")
</pallas_src>

<mosaic_0001>
module attributes {stable_mosaic.version = 11 : i64} {
  func.func @oracle_kernel(%arg0: memref<64x32xf32, #tpu.memory_space<vmem>>, %arg1: memref<8x1xi32, #tpu.memory_space<vmem>>, %arg2: memref<8x24xf32, #tpu.memory_space<vmem>>, %arg3: memref<32x128xf32, #tpu.memory_space<vmem>>, %arg4: memref<32x128xf32, #tpu.memory_space<vmem>>, %arg5: memref<1x128xf32, #tpu.memory_space<vmem>>, %arg6: memref<32x64xf32, #tpu.memory_space<vmem>>, %arg7: memref<24x64xf32, #tpu.memory_space<vmem>>, %arg8: memref<1x64xf32, #tpu.memory_space<vmem>>, %arg9: memref<64x128xf32, #tpu.memory_space<vmem>>, %arg10: memref<1x128xf32, #tpu.memory_space<vmem>>, %arg11: memref<8x128xf32, #tpu.memory_space<vmem>>) attributes {dimension_semantics = [], scalar_prefetch = 0 : i64, scratch_operands = 0 : i64, tpu.core_type = #tpu.core_type<tc>} {
    %c0 = arith.constant 0 : index
    %c0_0 = arith.constant 0 : index
    %0 = vector.load %arg1[%c0, %c0_0] : memref<8x1xi32, #tpu.memory_space<vmem>>, vector<8x1xi32>
    %c0_1 = arith.constant 0 : index
    %c0_2 = arith.constant 0 : index
    %1 = vector.load %arg4[%c0_1, %c0_2] : memref<32x128xf32, #tpu.memory_space<vmem>>, vector<32x128xf32>
    %c0_3 = arith.constant 0 : index
    %c0_4 = arith.constant 0 : index
    %2 = vector.load %arg0[%c0_3, %c0_4] : memref<64x32xf32, #tpu.memory_space<vmem>>, vector<64x32xf32>
    %c0_5 = arith.constant 0 : index
    %c0_6 = arith.constant 0 : index
    %3 = vector.load %arg3[%c0_5, %c0_6] : memref<32x128xf32, #tpu.memory_space<vmem>>, vector<32x128xf32>
    %cst = arith.constant dense<0.000000e+00> : vector<64x128xf32>
    %4 = tpu.matmul %2, %3, %cst {dimension_numbers = #tpu.dot_dimension_numbers<[1], [0], [0], [1], [0, 0, 1, 1], [], []>} : vector<64x32xf32>, vector<32x128xf32>, vector<64x128xf32> -> vector<64x128xf32>
    %c0_7 = arith.constant 0 : index
    %c0_8 = arith.constant 0 : index
    %5 = vector.load %arg5[%c0_7, %c0_8] : memref<1x128xf32, #tpu.memory_space<vmem>>, vector<1x128xf32>
    %6 = vector.broadcast %5 : vector<1x128xf32> to vector<64x128xf32>
    %7 = arith.addf %4, %6 : vector<64x128xf32>
    %c0_9 = arith.constant 0 : index
    %c0_10 = arith.constant 0 : index
    %8 = vector.load %arg2[%c0_9, %c0_10] : memref<8x24xf32, #tpu.memory_space<vmem>>, vector<8x24xf32>
    %c0_11 = arith.constant 0 : index
    %c0_12 = arith.constant 0 : index
    %9 = vector.load %arg7[%c0_11, %c0_12] : memref<24x64xf32, #tpu.memory_space<vmem>>, vector<24x64xf32>
    %cst_13 = arith.constant dense<0.000000e+00> : vector<8x64xf32>
    %10 = tpu.matmul %8, %9, %cst_13 {dimension_numbers = #tpu.dot_dimension_numbers<[1], [0], [0], [1], [0, 0, 1, 1], [], []>} : vector<8x24xf32>, vector<24x64xf32>, vector<8x64xf32> -> vector<8x64xf32>
    %c0_14 = arith.constant 0 : index
    %c0_15 = arith.constant 0 : index
    %11 = vector.load %arg8[%c0_14, %c0_15] : memref<1x64xf32, #tpu.memory_space<vmem>>, vector<1x64xf32>
    %12 = vector.broadcast %11 : vector<1x64xf32> to vector<8x64xf32>
    %13 = arith.addf %10, %12 : vector<8x64xf32>
    %cst_16 = arith.constant 0.000000e+00 : f32
    %14 = vector.broadcast %cst_16 : f32 to vector<8x32xf32>
    %cst_17 = arith.constant 0.000000e+00 : f32
    %15 = vector.broadcast %cst_17 : f32 to vector<8x32xf32>
    %16 = vector.extract_strided_slice %7 {offsets = [0, 0], sizes = [8, 128], strides = [1, 1]} : vector<64x128xf32> to vector<8x128xf32>
    %cst_18 = arith.constant dense<0.000000e+00> : vector<8x128xf32>
    %17 = tpu.matmul %14, %1, %cst_18 {dimension_numbers = #tpu.dot_dimension_numbers<[1], [0], [0], [1], [0, 0, 1, 1], [], []>} : vector<8x32xf32>, vector<32x128xf32>, vector<8x128xf32> -> vector<8x128xf32>
    %18 = arith.addf %16, %17 : vector<8x128xf32>
    %19 = arith.negf %18 : vector<8x128xf32>
    %20 = math.exp %19 : vector<8x128xf32>
    %cst_19 = arith.constant 1.000000e+00 : f32
    %21 = vector.broadcast %cst_19 : f32 to vector<8x128xf32>
    %22 = arith.addf %21, %20 : vector<8x128xf32>
    %23 = arith.divf %21, %22 : vector<8x128xf32>
    %24 = vector.extract_strided_slice %23 {offsets = [0, 0], sizes = [8, 32], strides = [1, 1]} : vector<8x128xf32> to vector<8x32xf32>
    %25 = vector.extract_strided_slice %23 {offsets = [0, 32], sizes = [8, 32], strides = [1, 1]} : vector<8x128xf32> to vector<8x32xf32>
    %26 = vector.extract_strided_slice %23 {offsets = [0, 96], sizes = [8, 32], strides = [1, 1]} : vector<8x128xf32> to vector<8x32xf32>
    %27 = vector.extract_strided_slice %18 {offsets = [0, 64], sizes = [8, 32], strides = [1, 1]} : vector<8x128xf32> to vector<8x32xf32>
    %28 = math.tanh %27 : vector<8x32xf32>
    %29 = arith.mulf %25, %15 : vector<8x32xf32>
    %30 = arith.mulf %24, %28 : vector<8x32xf32>
    %31 = arith.addf %29, %30 : vector<8x32xf32>
    %32 = math.tanh %31 : vector<8x32xf32>
    %33 = arith.mulf %26, %32 : vector<8x32xf32>
    %c0_i32 = arith.constant 0 : i32
    %34 = vector.broadcast %c0_i32 : i32 to vector<8x1xi32>
    %35 = arith.cmpi sgt, %0, %34 : vector<8x1xi32>
    %36 = vector.shape_cast %35 : vector<8x1xi1> to vector<8x1xi1>
    %37 = vector.broadcast %36 : vector<8x1xi1> to vector<8x32xi1>
    %38 = arith.select %37, %33, %14 : vector<8x32xi1>, vector<8x32xf32>
    %39 = vector.shape_cast %35 : vector<8x1xi1> to vector<8x1xi1>
    %40 = vector.broadcast %39 : vector<8x1xi1> to vector<8x32xi1>
    %41 = arith.select %40, %31, %15 : vector<8x32xi1>, vector<8x32xf32>
    %42 = vector.extract_strided_slice %7 {offsets = [8, 0], sizes = [8, 128], strides = [1, 1]} : vector<64x128xf32> to vector<8x128xf32>
    %cst_20 = arith.constant dense<0.000000e+00> : vector<8x128xf32>
    %43 = tpu.matmul %38, %1, %cst_20 {dimension_numbers = #tpu.dot_dimension_numbers<[1], [0], [0], [1], [0, 0, 1, 1], [], []>} : vector<8x32xf32>, vector<32x128xf32>, vector<8x128xf32> -> vector<8x128xf32>
    %44 = arith.addf %42, %43 : vector<8x128xf32>
    %45 = arith.negf %44 : vector<8x128xf32>
    %46 = math.exp %45 : vector<8x128xf32>
    %cst_21 = arith.constant 1.000000e+00 : f32
    %47 = vector.broadcast %cst_21 : f32 to vector<8x128xf32>
    %48 = arith.addf %47, %46 : vector<8x128xf32>
    %49 = arith.divf %47, %48 : vector<8x128xf32>
    %50 = vector.extract_strided_slice %49 {offsets = [0, 0], sizes = [8, 32], strides = [1, 1]} : vector<8x128xf32> to vector<8x32xf32>
    %51 = vector.extract_strided_slice %49 {offsets = [0, 32], sizes = [8, 32], strides = [1, 1]} : vector<8x128xf32> to vector<8x32xf32>
    %52 = vector.extract_strided_slice %49 {offsets = [0, 96], sizes = [8, 32], strides = [1, 1]} : vector<8x128xf32> to vector<8x32xf32>
    %53 = vector.extract_strided_slice %44 {offsets = [0, 64], sizes = [8, 32], strides = [1, 1]} : vector<8x128xf32> to vector<8x32xf32>
    %54 = math.tanh %53 : vector<8x32xf32>
    %55 = arith.mulf %51, %41 : vector<8x32xf32>
    %56 = arith.mulf %50, %54 : vector<8x32xf32>
    %57 = arith.addf %55, %56 : vector<8x32xf32>
    %58 = math.tanh %57 : vector<8x32xf32>
    %59 = arith.mulf %52, %58 : vector<8x32xf32>
    %c1_i32 = arith.constant 1 : i32
    %60 = vector.broadcast %c1_i32 : i32 to vector<8x1xi32>
    %61 = arith.cmpi sgt, %0, %60 : vector<8x1xi32>
    %62 = vector.shape_cast %61 : vector<8x1xi1> to vector<8x1xi1>
    %63 = vector.broadcast %62 : vector<8x1xi1> to vector<8x32xi1>
    %64 = arith.select %63, %59, %38 : vector<8x32xi1>, vector<8x32xf32>
    %65 = vector.shape_cast %61 : vector<8x1xi1> to vector<8x1xi1>
    %66 = vector.broadcast %65 : vector<8x1xi1> to vector<8x32xi1>
    %67 = arith.select %66, %57, %41 : vector<8x32xi1>, vector<8x32xf32>
    %68 = vector.extract_strided_slice %7 {offsets = [16, 0], sizes = [8, 128], strides = [1, 1]} : vector<64x128xf32> to vector<8x128xf32>
    %cst_22 = arith.constant dense<0.000000e+00> : vector<8x128xf32>
    %69 = tpu.matmul %64, %1, %cst_22 {dimension_numbers = #tpu.dot_dimension_numbers<[1], [0], [0], [1], [0, 0, 1, 1], [], []>} : vector<8x32xf32>, vector<32x128xf32>, vector<8x128xf32> -> vector<8x128xf32>
    %70 = arith.addf %68, %69 : vector<8x128xf32>
    %71 = arith.negf %70 : vector<8x128xf32>
    %72 = math.exp %71 : vector<8x128xf32>
    %cst_23 = arith.constant 1.000000e+00 : f32
    %73 = vector.broadcast %cst_23 : f32 to vector<8x128xf32>
    %74 = arith.addf %73, %72 : vector<8x128xf32>
    %75 = arith.divf %73, %74 : vector<8x128xf32>
    %76 = vector.extract_strided_slice %75 {offsets = [0, 0], sizes = [8, 32], strides = [1, 1]} : vector<8x128xf32> to vector<8x32xf32>
    %77 = vector.extract_strided_slice %75 {offsets = [0, 32], sizes = [8, 32], strides = [1, 1]} : vector<8x128xf32> to vector<8x32xf32>
    %78 = vector.extract_strided_slice %75 {offsets = [0, 96], sizes = [8, 32], strides = [1, 1]} : vector<8x128xf32> to vector<8x32xf32>
    %79 = vector.extract_strided_slice %70 {offsets = [0, 64], sizes = [8, 32], strides = [1, 1]} : vector<8x128xf32> to vector<8x32xf32>
    %80 = math.tanh %79 : vector<8x32xf32>
    %81 = arith.mulf %77, %67 : vector<8x32xf32>
    %82 = arith.mulf %76, %80 : vector<8x32xf32>
    %83 = arith.addf %81, %82 : vector<8x32xf32>
    %84 = math.tanh %83 : vector<8x32xf32>
    %85 = arith.mulf %78, %84 : vector<8x32xf32>
    %c2_i32 = arith.constant 2 : i32
    %86 = vector.broadcast %c2_i32 : i32 to vector<8x1xi32>
    %87 = arith.cmpi sgt, %0, %86 : vector<8x1xi32>
    %88 = vector.shape_cast %87 : vector<8x1xi1> to vector<8x1xi1>
    %89 = vector.broadcast %88 : vector<8x1xi1> to vector<8x32xi1>
    %90 = arith.select %89, %85, %64 : vector<8x32xi1>, vector<8x32xf32>
    %91 = vector.shape_cast %87 : vector<8x1xi1> to vector<8x1xi1>
    %92 = vector.broadcast %91 : vector<8x1xi1> to vector<8x32xi1>
    %93 = arith.select %92, %83, %67 : vector<8x32xi1>, vector<8x32xf32>
    %94 = vector.extract_strided_slice %7 {offsets = [24, 0], sizes = [8, 128], strides = [1, 1]} : vector<64x128xf32> to vector<8x128xf32>
    %cst_24 = arith.constant dense<0.000000e+00> : vector<8x128xf32>
    %95 = tpu.matmul %90, %1, %cst_24 {dimension_numbers = #tpu.dot_dimension_numbers<[1], [0], [0], [1], [0, 0, 1, 1], [], []>} : vector<8x32xf32>, vector<32x128xf32>, vector<8x128xf32> -> vector<8x128xf32>
    %96 = arith.addf %94, %95 : vector<8x128xf32>
    %97 = arith.negf %96 : vector<8x128xf32>
    %98 = math.exp %97 : vector<8x128xf32>
    %cst_25 = arith.constant 1.000000e+00 : f32
    %99 = vector.broadcast %cst_25 : f32 to vector<8x128xf32>
    %100 = arith.addf %99, %98 : vector<8x128xf32>
    %101 = arith.divf %99, %100 : vector<8x128xf32>
    %102 = vector.extract_strided_slice %101 {offsets = [0, 0], sizes = [8, 32], strides = [1, 1]} : vector<8x128xf32> to vector<8x32xf32>
    %103 = vector.extract_strided_slice %101 {offsets = [0, 32], sizes = [8, 32], strides = [1, 1]} : vector<8x128xf32> to vector<8x32xf32>
    %104 = vector.extract_strided_slice %101 {offsets = [0, 96], sizes = [8, 32], strides = [1, 1]} : vector<8x128xf32> to vector<8x32xf32>
    %105 = vector.extract_strided_slice %96 {offsets = [0, 64], sizes = [8, 32], strides = [1, 1]} : vector<8x128xf32> to vector<8x32xf32>
    %106 = math.tanh %105 : vector<8x32xf32>
    %107 = arith.mulf %103, %93 : vector<8x32xf32>
    %108 = arith.mulf %102, %106 : vector<8x32xf32>
    %109 = arith.addf %107, %108 : vector<8x32xf32>
    %110 = math.tanh %109 : vector<8x32xf32>
    %111 = arith.mulf %104, %110 : vector<8x32xf32>
    %c3_i32 = arith.constant 3 : i32
    %112 = vector.broadcast %c3_i32 : i32 to vector<8x1xi32>
    %113 = arith.cmpi sgt, %0, %112 : vector<8x1xi32>
    %114 = vector.shape_cast %113 : vector<8x1xi1> to vector<8x1xi1>
    %115 = vector.broadcast %114 : vector<8x1xi1> to vector<8x32xi1>
    %116 = arith.select %115, %111, %90 : vector<8x32xi1>, vector<8x32xf32>
    %117 = vector.shape_cast %113 : vector<8x1xi1> to vector<8x1xi1>
    %118 = vector.broadcast %117 : vector<8x1xi1> to vector<8x32xi1>
    %119 = arith.select %118, %109, %93 : vector<8x32xi1>, vector<8x32xf32>
    %120 = vector.extract_strided_slice %7 {offsets = [32, 0], sizes = [8, 128], strides = [1, 1]} : vector<64x128xf32> to vector<8x128xf32>
    %cst_26 = arith.constant dense<0.000000e+00> : vector<8x128xf32>
    %121 = tpu.matmul %116, %1, %cst_26 {dimension_numbers = #tpu.dot_dimension_numbers<[1], [0], [0], [1], [0, 0, 1, 1], [], []>} : vector<8x32xf32>, vector<32x128xf32>, vector<8x128xf32> -> vector<8x128xf32>
    %122 = arith.addf %120, %121 : vector<8x128xf32>
    %123 = arith.negf %122 : vector<8x128xf32>
    %124 = math.exp %123 : vector<8x128xf32>
    %cst_27 = arith.constant 1.000000e+00 : f32
    %125 = vector.broadcast %cst_27 : f32 to vector<8x128xf32>
    %126 = arith.addf %125, %124 : vector<8x128xf32>
    %127 = arith.divf %125, %126 : vector<8x128xf32>
    %128 = vector.extract_strided_slice %127 {offsets = [0, 0], sizes = [8, 32], strides = [1, 1]} : vector<8x128xf32> to vector<8x32xf32>
    %129 = vector.extract_strided_slice %127 {offsets = [0, 32], sizes = [8, 32], strides = [1, 1]} : vector<8x128xf32> to vector<8x32xf32>
    %130 = vector.extract_strided_slice %127 {offsets = [0, 96], sizes = [8, 32], strides = [1, 1]} : vector<8x128xf32> to vector<8x32xf32>
    %131 = vector.extract_strided_slice %122 {offsets = [0, 64], sizes = [8, 32], strides = [1, 1]} : vector<8x128xf32> to vector<8x32xf32>
    %132 = math.tanh %131 : vector<8x32xf32>
    %133 = arith.mulf %129, %119 : vector<8x32xf32>
    %134 = arith.mulf %128, %132 : vector<8x32xf32>
    %135 = arith.addf %133, %134 : vector<8x32xf32>
    %136 = math.tanh %135 : vector<8x32xf32>
    %137 = arith.mulf %130, %136 : vector<8x32xf32>
    %c4_i32 = arith.constant 4 : i32
    %138 = vector.broadcast %c4_i32 : i32 to vector<8x1xi32>
    %139 = arith.cmpi sgt, %0, %138 : vector<8x1xi32>
    %140 = vector.shape_cast %139 : vector<8x1xi1> to vector<8x1xi1>
    %141 = vector.broadcast %140 : vector<8x1xi1> to vector<8x32xi1>
    %142 = arith.select %141, %137, %116 : vector<8x32xi1>, vector<8x32xf32>
    %143 = vector.shape_cast %139 : vector<8x1xi1> to vector<8x1xi1>
    %144 = vector.broadcast %143 : vector<8x1xi1> to vector<8x32xi1>
    %145 = arith.select %144, %135, %119 : vector<8x32xi1>, vector<8x32xf32>
    %146 = vector.extract_strided_slice %7 {offsets = [40, 0], sizes = [8, 128], strides = [1, 1]} : vector<64x128xf32> to vector<8x128xf32>
    %cst_28 = arith.constant dense<0.000000e+00> : vector<8x128xf32>
    %147 = tpu.matmul %142, %1, %cst_28 {dimension_numbers = #tpu.dot_dimension_numbers<[1], [0], [0], [1], [0, 0, 1, 1], [], []>} : vector<8x32xf32>, vector<32x128xf32>, vector<8x128xf32> -> vector<8x128xf32>
    %148 = arith.addf %146, %147 : vector<8x128xf32>
    %149 = arith.negf %148 : vector<8x128xf32>
    %150 = math.exp %149 : vector<8x128xf32>
    %cst_29 = arith.constant 1.000000e+00 : f32
    %151 = vector.broadcast %cst_29 : f32 to vector<8x128xf32>
    %152 = arith.addf %151, %150 : vector<8x128xf32>
    %153 = arith.divf %151, %152 : vector<8x128xf32>
    %154 = vector.extract_strided_slice %153 {offsets = [0, 0], sizes = [8, 32], strides = [1, 1]} : vector<8x128xf32> to vector<8x32xf32>
    %155 = vector.extract_strided_slice %153 {offsets = [0, 32], sizes = [8, 32], strides = [1, 1]} : vector<8x128xf32> to vector<8x32xf32>
    %156 = vector.extract_strided_slice %153 {offsets = [0, 96], sizes = [8, 32], strides = [1, 1]} : vector<8x128xf32> to vector<8x32xf32>
    %157 = vector.extract_strided_slice %148 {offsets = [0, 64], sizes = [8, 32], strides = [1, 1]} : vector<8x128xf32> to vector<8x32xf32>
    %158 = math.tanh %157 : vector<8x32xf32>
    %159 = arith.mulf %155, %145 : vector<8x32xf32>
    %160 = arith.mulf %154, %158 : vector<8x32xf32>
    %161 = arith.addf %159, %160 : vector<8x32xf32>
    %162 = math.tanh %161 : vector<8x32xf32>
    %163 = arith.mulf %156, %162 : vector<8x32xf32>
    %c5_i32 = arith.constant 5 : i32
    %164 = vector.broadcast %c5_i32 : i32 to vector<8x1xi32>
    %165 = arith.cmpi sgt, %0, %164 : vector<8x1xi32>
    %166 = vector.shape_cast %165 : vector<8x1xi1> to vector<8x1xi1>
    %167 = vector.broadcast %166 : vector<8x1xi1> to vector<8x32xi1>
    %168 = arith.select %167, %163, %142 : vector<8x32xi1>, vector<8x32xf32>
    %169 = vector.shape_cast %165 : vector<8x1xi1> to vector<8x1xi1>
    %170 = vector.broadcast %169 : vector<8x1xi1> to vector<8x32xi1>
    %171 = arith.select %170, %161, %145 : vector<8x32xi1>, vector<8x32xf32>
    %172 = vector.extract_strided_slice %7 {offsets = [48, 0], sizes = [8, 128], strides = [1, 1]} : vector<64x128xf32> to vector<8x128xf32>
    %cst_30 = arith.constant dense<0.000000e+00> : vector<8x128xf32>
    %173 = tpu.matmul %168, %1, %cst_30 {dimension_numbers = #tpu.dot_dimension_numbers<[1], [0], [0], [1], [0, 0, 1, 1], [], []>} : vector<8x32xf32>, vector<32x128xf32>, vector<8x128xf32> -> vector<8x128xf32>
    %174 = arith.addf %172, %173 : vector<8x128xf32>
    %175 = arith.negf %174 : vector<8x128xf32>
    %176 = math.exp %175 : vector<8x128xf32>
    %cst_31 = arith.constant 1.000000e+00 : f32
    %177 = vector.broadcast %cst_31 : f32 to vector<8x128xf32>
    %178 = arith.addf %177, %176 : vector<8x128xf32>
    %179 = arith.divf %177, %178 : vector<8x128xf32>
    %180 = vector.extract_strided_slice %179 {offsets = [0, 0], sizes = [8, 32], strides = [1, 1]} : vector<8x128xf32> to vector<8x32xf32>
    %181 = vector.extract_strided_slice %179 {offsets = [0, 32], sizes = [8, 32], strides = [1, 1]} : vector<8x128xf32> to vector<8x32xf32>
    %182 = vector.extract_strided_slice %179 {offsets = [0, 96], sizes = [8, 32], strides = [1, 1]} : vector<8x128xf32> to vector<8x32xf32>
    %183 = vector.extract_strided_slice %174 {offsets = [0, 64], sizes = [8, 32], strides = [1, 1]} : vector<8x128xf32> to vector<8x32xf32>
    %184 = math.tanh %183 : vector<8x32xf32>
    %185 = arith.mulf %181, %171 : vector<8x32xf32>
    %186 = arith.mulf %180, %184 : vector<8x32xf32>
    %187 = arith.addf %185, %186 : vector<8x32xf32>
    %188 = math.tanh %187 : vector<8x32xf32>
    %189 = arith.mulf %182, %188 : vector<8x32xf32>
    %c6_i32 = arith.constant 6 : i32
    %190 = vector.broadcast %c6_i32 : i32 to vector<8x1xi32>
    %191 = arith.cmpi sgt, %0, %190 : vector<8x1xi32>
    %192 = vector.shape_cast %191 : vector<8x1xi1> to vector<8x1xi1>
    %193 = vector.broadcast %192 : vector<8x1xi1> to vector<8x32xi1>
    %194 = arith.select %193, %189, %168 : vector<8x32xi1>, vector<8x32xf32>
    %195 = vector.shape_cast %191 : vector<8x1xi1> to vector<8x1xi1>
    %196 = vector.broadcast %195 : vector<8x1xi1> to vector<8x32xi1>
    %197 = arith.select %196, %187, %171 : vector<8x32xi1>, vector<8x32xf32>
    %198 = vector.extract_strided_slice %7 {offsets = [56, 0], sizes = [8, 128], strides = [1, 1]} : vector<64x128xf32> to vector<8x128xf32>
    %cst_32 = arith.constant dense<0.000000e+00> : vector<8x128xf32>
    %199 = tpu.matmul %194, %1, %cst_32 {dimension_numbers = #tpu.dot_dimension_numbers<[1], [0], [0], [1], [0, 0, 1, 1], [], []>} : vector<8x32xf32>, vector<32x128xf32>, vector<8x128xf32> -> vector<8x128xf32>
    %200 = arith.addf %198, %199 : vector<8x128xf32>
    %201 = arith.negf %200 : vector<8x128xf32>
    %202 = math.exp %201 : vector<8x128xf32>
    %cst_33 = arith.constant 1.000000e+00 : f32
    %203 = vector.broadcast %cst_33 : f32 to vector<8x128xf32>
    %204 = arith.addf %203, %202 : vector<8x128xf32>
    %205 = arith.divf %203, %204 : vector<8x128xf32>
    %206 = vector.extract_strided_slice %205 {offsets = [0, 0], sizes = [8, 32], strides = [1, 1]} : vector<8x128xf32> to vector<8x32xf32>
    %207 = vector.extract_strided_slice %205 {offsets = [0, 32], sizes = [8, 32], strides = [1, 1]} : vector<8x128xf32> to vector<8x32xf32>
    %208 = vector.extract_strided_slice %205 {offsets = [0, 96], sizes = [8, 32], strides = [1, 1]} : vector<8x128xf32> to vector<8x32xf32>
    %209 = vector.extract_strided_slice %200 {offsets = [0, 64], sizes = [8, 32], strides = [1, 1]} : vector<8x128xf32> to vector<8x32xf32>
    %210 = math.tanh %209 : vector<8x32xf32>
    %211 = arith.mulf %207, %197 : vector<8x32xf32>
    %212 = arith.mulf %206, %210 : vector<8x32xf32>
    %213 = arith.addf %211, %212 : vector<8x32xf32>
    %214 = math.tanh %213 : vector<8x32xf32>
    %215 = arith.mulf %208, %214 : vector<8x32xf32>
    %c7_i32 = arith.constant 7 : i32
    %216 = vector.broadcast %c7_i32 : i32 to vector<8x1xi32>
    %217 = arith.cmpi sgt, %0, %216 : vector<8x1xi32>
    %218 = vector.shape_cast %217 : vector<8x1xi1> to vector<8x1xi1>
    %219 = vector.broadcast %218 : vector<8x1xi1> to vector<8x32xi1>
    %220 = arith.select %219, %215, %194 : vector<8x32xi1>, vector<8x32xf32>
    %c0_34 = arith.constant 0 : index
    %c0_35 = arith.constant 0 : index
    %221 = vector.load %arg6[%c0_34, %c0_35] : memref<32x64xf32, #tpu.memory_space<vmem>>, vector<32x64xf32>
    %cst_36 = arith.constant dense<0.000000e+00> : vector<8x64xf32>
    %222 = tpu.matmul %220, %221, %cst_36 {dimension_numbers = #tpu.dot_dimension_numbers<[1], [0], [0], [1], [0, 0, 1, 1], [], []>} : vector<8x32xf32>, vector<32x64xf32>, vector<8x64xf32> -> vector<8x64xf32>
    %223 = arith.addf %13, %222 : vector<8x64xf32>
    %cst_37 = arith.constant 0.000000e+00 : f32
    %224 = vector.broadcast %cst_37 : f32 to vector<8x64xf32>
    %225 = arith.maximumf %223, %224 : vector<8x64xf32>
    %c0_38 = arith.constant 0 : index
    %c0_39 = arith.constant 0 : index
    %226 = vector.load %arg9[%c0_38, %c0_39] : memref<64x128xf32, #tpu.memory_space<vmem>>, vector<64x128xf32>
    %cst_40 = arith.constant dense<0.000000e+00> : vector<8x128xf32>
    %227 = tpu.matmul %225, %226, %cst_40 {dimension_numbers = #tpu.dot_dimension_numbers<[1], [0], [0], [1], [0, 0, 1, 1], [], []>} : vector<8x64xf32>, vector<64x128xf32>, vector<8x128xf32> -> vector<8x128xf32>
    %c0_41 = arith.constant 0 : index
    %c0_42 = arith.constant 0 : index
    %228 = vector.load %arg10[%c0_41, %c0_42] : memref<1x128xf32, #tpu.memory_space<vmem>>, vector<1x128xf32>
    %229 = vector.broadcast %228 : vector<1x128xf32> to vector<8x128xf32>
    %230 = arith.addf %227, %229 : vector<8x128xf32>
    %c0_43 = arith.constant 0 : index
    %c0_44 = arith.constant 0 : index
    %231 = vector.load %arg11[%c0_43, %c0_44] : memref<8x128xf32, #tpu.memory_space<vmem>>, vector<8x128xf32>
    tpu.vector_store %arg11[%c0_43, %c0_44], %230 {strides = array<i32>} : memref<8x128xf32, #tpu.memory_space<vmem>>, vector<8x128xf32>,
    return
  }
}

</mosaic_0001>

<llo_original>
// kernel: oracle_forward.1
$region0: #{oracle_forward.1}
  #allocation0 [shape = 'u32[]', space=smem, size = 0x4, offset = 0x4, fixed_abs, tag = 'smem constant byte address 0x4 - core index']
  #allocation1 [shape = 'u32[144,128]{1,0:T(1,128)}', space=vmem, size = 0x12000, scoped, tag = 'internal scratch']
  %s0 = inlined_call_operand.vmem [shape: f32[64,32], index: 0, kind: input, shape index: {}]
  %s1 = inlined_call_operand.vmem [shape: s32[8,1], index: 1, kind: input, shape index: {}]
  %s2 = inlined_call_operand.vmem [shape: f32[8,24], index: 2, kind: input, shape index: {}]
  %s3 = inlined_call_operand.vmem [shape: f32[32,128], index: 3, kind: input, shape index: {}]
  %s4 = inlined_call_operand.vmem [shape: f32[32,128], index: 4, kind: input, shape index: {}]
  %s5 = inlined_call_operand.vmem [shape: f32[1,128], index: 5, kind: input, shape index: {}]
  %s6 = inlined_call_operand.vmem [shape: f32[32,64], index: 6, kind: input, shape index: {}]
  %s7 = inlined_call_operand.vmem [shape: f32[24,64], index: 7, kind: input, shape index: {}]
  %s8 = inlined_call_operand.vmem [shape: f32[1,64], index: 8, kind: input, shape index: {}]
  %s9 = inlined_call_operand.vmem [shape: f32[64,128], index: 9, kind: input, shape index: {}]
  %s10 = inlined_call_operand.vmem [shape: f32[1,128], index: 10, kind: input, shape index: {}]
  %s11 = inlined_call_operand.vmem [shape: f32[8,128], index: 11, kind: output, shape index: {}]
  %s12 = sld [smem:[#allocation0]]
  $region54: #{oracle_forward.1} parent=0
    _
  %s14 = ssub.s32 1, %s12
  %s15 = scalar_select 0, %s14, %s12
  // Predicated region
  $region2: #{oracle_forward.1} parent=0 // pred_check
    _
  $region3: #{oracle_forward.1} parent=0 // pred_check_branch
    %17 = sbr.rel (0) target = $region5
  $region4: #{oracle_forward.1} parent=0 // pred_region
    _
  $region5: #{oracle_forward.1} parent=0 // pred_fallthru
    _
  // Predicated region
  $region6: #{oracle_forward.1} parent=0 // pred_check
    _
  $region7: #{oracle_forward.1} parent=0 // pred_check_branch
    %19 = sbr.rel (0) target = $region9
  $region8: #{oracle_forward.1} parent=0 // pred_region
    _
  $region9: #{oracle_forward.1} parent=0 // pred_fallthru
    _
  // Predicated region
  $region10: #{oracle_forward.1} parent=0 // pred_check
    _
  $region11: #{oracle_forward.1} parent=0 // pred_check_branch
    %21 = sbr.rel (0) target = $region13
  $region12: #{oracle_forward.1} parent=0 // pred_region
    _
  $region13: #{oracle_forward.1} parent=0 // pred_fallthru
    _
  // Predicated region
  $region14: #{oracle_forward.1} parent=0 // pred_check
    _
  $region15: #{oracle_forward.1} parent=0 // pred_check_branch
    %23 = sbr.rel (0) target = $region17
  $region16: #{oracle_forward.1} parent=0 // pred_region
    _
  $region17: #{oracle_forward.1} parent=0 // pred_fallthru
    _
  // Predicated region
  $region18: #{oracle_forward.1} parent=0 // pred_check
    _
  $region19: #{oracle_forward.1} parent=0 // pred_check_branch
    %25 = sbr.rel (0) target = $region21
  $region20: #{oracle_forward.1} parent=0 // pred_region
    _
  $region21: #{oracle_forward.1} parent=0 // pred_fallthru
    _
  // Predicated region
  $region22: #{oracle_forward.1} parent=0 // pred_check
    _
  $region23: #{oracle_forward.1} parent=0 // pred_check_branch
    %27 = sbr.rel (0) target = $region25
  $region24: #{oracle_forward.1} parent=0 // pred_region
    _
  $region25: #{oracle_forward.1} parent=0 // pred_fallthru
    _
  // Predicated region
  $region26: #{oracle_forward.1} parent=0 // pred_check
    _
  $region27: #{oracle_forward.1} parent=0 // pred_check_branch
    %29 = sbr.rel (0) target = $region29
  $region28: #{oracle_forward.1} parent=0 // pred_region
    _
  $region29: #{oracle_forward.1} parent=0 // pred_fallthru
    _
  // Predicated region
  $region30: #{oracle_forward.1} parent=0 // pred_check
    _
  $region31: #{oracle_forward.1} parent=0 // pred_check_branch
    %31 = sbr.rel (0) target = $region33
  $region32: #{oracle_forward.1} parent=0 // pred_region
    _
  $region33: #{oracle_forward.1} parent=0 // pred_fallthru
    _
  // Predicated region
  $region34: #{oracle_forward.1} parent=0 // pred_check
    _
  $region35: #{oracle_forward.1} parent=0 // pred_check_branch
    %33 = sbr.rel (0) target = $region37
  $region36: #{oracle_forward.1} parent=0 // pred_region
    _
  $region37: #{oracle_forward.1} parent=0 // pred_fallthru
    _
  // Predicated region
  $region38: #{oracle_forward.1} parent=0 // pred_check
    _
  $region39: #{oracle_forward.1} parent=0 // pred_check_branch
    %35 = sbr.rel (0) target = $region41
  $region40: #{oracle_forward.1} parent=0 // pred_region
    _
  $region41: #{oracle_forward.1} parent=0 // pred_fallthru
    _
  // Predicated region
  $region42: #{oracle_forward.1} parent=0 // pred_check
    _
  $region43: #{oracle_forward.1} parent=0 // pred_check_branch
    %37 = sbr.rel (0) target = $region45
  $region44: #{oracle_forward.1} parent=0 // pred_region
    _
  $region45: #{oracle_forward.1} parent=0 // pred_fallthru
    _
  %v38 = vld [vmem:[%s1] sm:$0xff]
  %v39 = vld [vmem:[%s4] sm:$0xff]
  %v40 = vld [vmem:[%s4 + $0x8] sm:$0xff]
  %v41 = vld [vmem:[%s4 + $0x10] sm:$0xff]
  %v42 = vld [vmem:[%s4 + $0x18] sm:$0xff]
  %v43 = vld [vmem:[%s0] sm:$0xff]
  %v44 = vld [vmem:[%s0 + $0x8] sm:$0xff]
  %v45 = vld [vmem:[%s0 + $0x10] sm:$0xff]
  %v46 = vld [vmem:[%s0 + $0x18] sm:$0xff]
  %v47 = vld [vmem:[%s0 + $0x20] sm:$0xff]
  %v48 = vld [vmem:[%s0 + $0x28] sm:$0xff]
  %v49 = vld [vmem:[%s0 + $0x30] sm:$0xff]
  %v50 = vld [vmem:[%s0 + $0x38] sm:$0xff]
  %v51 = vld [vmem:[%s3] sm:$0xff]
  %v52 = vld [vmem:[%s3 + $0x8] sm:$0xff]
  %v53 = vld [vmem:[%s3 + $0x10] sm:$0xff]
  %v54 = vld [vmem:[%s3 + $0x18] sm:$0xff]
  %v55 = vld [vmem:[%s5] sm:$0x1]
  %v57 = vlaneseq
  %v58 = vshrl.u32 %v57, 7
  %v59 = vsub.s32 0, %v58
  %v60 = vrot.slane %v55, %v59
  %vm62 = vcmask 261120
  %v64 = vsel %vm62, %v43, 0
  %v67 = vsel %vm62, %v44, 0
  %v70 = vsel %vm62, %v45, 0
  %v73 = vsel %vm62, %v46, 0
  %v76 = vsel %vm62, %v47, 0
  %v79 = vsel %vm62, %v48, 0
  %v82 = vsel %vm62, %v49, 0
  %v85 = vsel %vm62, %v50, 0
  %87 = vmatprep.subr.mxu0 0.0
  %88 = vmatpush1.msra.mxu0 0.0
  %89 = vmatprep.subr.mxu0 0.0
  %90 = vmatpush1.msra.mxu0 0.0
  %91 = vmatprep.subr.mxu0 0.0
  %92 = vmatpush1.msra.mxu0 0.0
  %93 = vmatprep.subr.mxu0 0.0
  %94 = vmatpush1.msra.mxu0 0.0
  %95 = vmatprep.subr.mxu0 0.0
  %96 = vmatpush1.msra.mxu0 0.0
  %97 = vmatprep.subr.mxu0 0.0
  %98 = vmatpush1.msra.mxu0 0.0
  %99 = vmatprep.subr.mxu0 0.0
  %100 = vmatpush1.msra.mxu0 0.0
  %101 = vmatprep.subr.mxu0 0.0
  %102 = vmatpush1.msra.mxu0 0.0
  %103 = vmatprep.subr.mxu0 0.0
  %104 = vmatpush1.msra.mxu0 0.0
  %105 = vmatprep.subr.mxu0 0.0
  %106 = vmatpush1.msra.mxu0 0.0
  %107 = vmatprep.subr.mxu0 0.0
  %108 = vmatpush1.msra.mxu0 0.0
  %109 = vmatprep.subr.mxu0 0.0
  %110 = vmatpush1.msra.mxu0 0.0
  %111 = vmatprep.subr.mxu0 0.0
  %112 = vmatpush1.msra.mxu0 %v54
  %113 = vmatprep.subr.mxu0 0.0
  %114 = vmatpush1.msra.mxu0 %v53
  %115 = vmatprep.subr.mxu0 0.0
  %116 = vmatpush1.msra.mxu0 %v52
  %117 = vmatprep.subr.mxu0 0.0
  %118 = vmatpush1.msra.mxu0 %v51
  %119 = vmatprep.subr.mxu0 0.0
  %120 = vmatpush2.msra.mxu0 0.0
  %121 = vmatprep.subr.mxu0 0.0
  %122 = vmatpush2.msra.mxu0 0.0
  %123 = vmatprep.subr.mxu0 0.0
  %124 = vmatpush2.msra.mxu0 0.0
  %125 = vmatprep.subr.mxu0 0.0
  %126 = vmatpush2.msra.mxu0 0.0
  %127 = vmatprep.subr.mxu0 0.0
  %128 = vmatpush2.msra.mxu0 0.0
  %129 = vmatprep.subr.mxu0 0.0
  %130 = vmatpush2.msra.mxu0 0.0
  %131 = vmatprep.subr.mxu0 0.0
  %132 = vmatpush2.msra.mxu0 0.0
  %133 = vmatprep.subr.mxu0 0.0
  %134 = vmatpush2.msra.mxu0 0.0
  %135 = vmatprep.subr.mxu0 0.0
  %136 = vmatpush2.msra.mxu0 0.0
  %137 = vmatprep.subr.mxu0 0.0
  %138 = vmatpush2.msra.mxu0 0.0
  %139 = vmatprep.subr.mxu0 0.0
  %140 = vmatpush2.msra.mxu0 0.0
  %141 = vmatprep.subr.mxu0 0.0
  %142 = vmatpush2.msra.mxu0 0.0
  %143 = vmatprep.subr.mxu0 0.0
  %144 = vmatpush2.msra.mxu0 0.0
  %145 = vmatprep.subr.mxu0 0.0
  %146 = vmatpush2.msra.mxu0 0.0
  %147 = vmatprep.subr.mxu0 0.0
  %148 = vmatpush2.msra.mxu0 0.0
  %149 = vmatprep.subr.mxu0 0.0
  %150 = vmatpush2.msra.mxu0 0.0
  %151 = vmatprep.mubr.f32.mxu0 0.0
  %152 = vmatmul.mubr.f32.gmra.mxu0 %v64
  %v153 = vpop.f32.mrf.mxu0
  %v154 = vadd.f32 %v60, %v153
  %v155 = vpop.f32.mrf.mxu0
  %156 = vmatprep.mubr.f32.mxu0 0.0
  %157 = vmatmul.mubr.f32.gmra.mxu0 %v67
  %v158 = vpop.f32.mrf.mxu0
  %v159 = vadd.f32 %v60, %v158
  %v160 = vpop.f32.mrf.mxu0
  %161 = vmatprep.mubr.f32.mxu0 0.0
  %162 = vmatmul.mubr.f32.gmra.mxu0 %v70
  %v163 = vpop.f32.mrf.mxu0
  %v164 = vadd.f32 %v60, %v163
  %v165 = vpop.f32.mrf.mxu0
  %166 = vmatprep.mubr.f32.mxu0 0.0
  %167 = vmatmul.mubr.f32.gmra.mxu0 %v73
  %v168 = vpop.f32.mrf.mxu0
  %v169 = vadd.f32 %v60, %v168
  %v170 = vpop.f32.mrf.mxu0
  %171 = vmatprep.mubr.f32.mxu0 0.0
  %172 = vmatmul.mubr.f32.gmra.mxu0 %v76
  %v173 = vpop.f32.mrf.mxu0
  %v174 = vadd.f32 %v60, %v173
  %v175 = vpop.f32.mrf.mxu0
  %176 = vmatprep.mubr.f32.mxu0 0.0
  %177 = vmatmul.mubr.f32.gmra.mxu0 %v79
  %v178 = vpop.f32.mrf.mxu0
  %v179 = vadd.f32 %v60, %v178
  %v180 = vpop.f32.mrf.mxu0
  %181 = vmatprep.mubr.f32.mxu0 0.0
  %182 = vmatmul.mubr.f32.gmra.mxu0 %v82
  %v183 = vpop.f32.mrf.mxu0
  %v184 = vadd.f32 %v60, %v183
  %v185 = vpop.f32.mrf.mxu0
  %186 = vmatprep.mubr.f32.mxu0 0.0
  %187 = vmatmul.mubr.f32.gmra.mxu0 %v85
  %v188 = vpop.f32.mrf.mxu0
  %v189 = vadd.f32 %v60, %v188
  %v190 = vpop.f32.mrf.mxu0
  %191 = vdwg.mxu0
  %v192 = vld [vmem:[%s2] sm:$0xff]
  %v193 = vld [vmem:[%s7] sm:$0xff]
  %v194 = vld [vmem:[%s7 + $0x8] sm:$0xff]
  %v195 = vld [vmem:[%s7 + $0x10] sm:$0xff]
  %v196 = vld [vmem:[%s8] sm:$0x1]
  %v198 = vlaneseq
  %v199 = vshrl.u32 %v198, 7
  %v200 = vsub.s32 0, %v199
  %v201 = vrot.slane %v196, %v200
  %vm203 = vcmask 195584
  %v205 = vsel %vm203, %v192, 0
  %207 = vmatprep.subr.mxu0 0.0
  %208 = vmatpush1.msra.mxu0 0.0
  %209 = vmatprep.subr.mxu0 0.0
  %210 = vmatpush1.msra.mxu0 0.0
  %211 = vmatprep.subr.mxu0 0.0
  %212 = vmatpush1.msra.mxu0 0.0
  %213 = vmatprep.subr.mxu0 0.0
  %214 = vmatpush1.msra.mxu0 0.0
  %215 = vmatprep.subr.mxu0 0.0
  %216 = vmatpush1.msra.mxu0 0.0
  %217 = vmatprep.subr.mxu0 0.0
  %218 = vmatpush1.msra.mxu0 0.0
  %219 = vmatprep.subr.mxu0 0.0
  %220 = vmatpush1.msra.mxu0 0.0
  %221 = vmatprep.subr.mxu0 0.0
  %222 = vmatpush1.msra.mxu0 0.0
  %223 = vmatprep.subr.mxu0 0.0
  %224 = vmatpush1.msra.mxu0 0.0
  %225 = vmatprep.subr.mxu0 0.0
  %226 = vmatpush1.msra.mxu0 0.0
  %227 = vmatprep.subr.mxu0 0.0
  %228 = vmatpush1.msra.mxu0 0.0
  %229 = vmatprep.subr.mxu0 0.0
  %230 = vmatpush1.msra.mxu0 0.0
  %231 = vmatprep.subr.mxu0 0.0
  %232 = vmatpush1.msra.mxu0 0.0
  %233 = vmatprep.subr.mxu0 0.0
  %234 = vmatpush1.msra.mxu0 %v195
  %235 = vmatprep.subr.mxu0 0.0
  %236 = vmatpush1.msra.mxu0 %v194
  %237 = vmatprep.subr.mxu0 0.0
  %238 = vmatpush1.msra.mxu0 %v193
  %239 = vmatprep.subr.mxu0 0.0
  %240 = vmatpush2.msra.mxu0 0.0
  %241 = vmatprep.subr.mxu0 0.0
  %242 = vmatpush2.msra.mxu0 0.0
  %243 = vmatprep.subr.mxu0 0.0
  %244 = vmatpush2.msra.mxu0 0.0
  %245 = vmatprep.subr.mxu0 0.0
  %246 = vmatpush2.msra.mxu0 0.0
  %247 = vmatprep.subr.mxu0 0.0
  %248 = vmatpush2.msra.mxu0 0.0
  %249 = vmatprep.subr.mxu0 0.0
  %250 = vmatpush2.msra.mxu0 0.0
  %251 = vmatprep.subr.mxu0 0.0
  %252 = vmatpush2.msra.mxu0 0.0
  %253 = vmatprep.subr.mxu0 0.0
  %254 = vmatpush2.msra.mxu0 0.0
  %255 = vmatprep.subr.mxu0 0.0
  %256 = vmatpush2.msra.mxu0 0.0
  %257 = vmatprep.subr.mxu0 0.0
  %258 = vmatpush2.msra.mxu0 0.0
  %259 = vmatprep.subr.mxu0 0.0
  %260 = vmatpush2.msra.mxu0 0.0
  %261 = vmatprep.subr.mxu0 0.0
  %262 = vmatpush2.msra.mxu0 0.0
  %263 = vmatprep.subr.mxu0 0.0
  %264 = vmatpush2.msra.mxu0 0.0
  %265 = vmatprep.subr.mxu0 0.0
  %266 = vmatpush2.msra.mxu0 0.0
  %267 = vmatprep.subr.mxu0 0.0
  %268 = vmatpush2.msra.mxu0 0.0
  %269 = vmatprep.subr.mxu0 0.0
  %270 = vmatpush2.msra.mxu0 0.0
  %271 = vmatprep.mubr.f32.mxu0 0.0
  %272 = vmatmul.mubr.f32.gmra.mxu0 %v205
  %v273 = vpop.f32.mrf.mxu0
  %v274 = vadd.f32 %v201, %v273
  %v275 = vpop.f32.mrf.mxu0
  %276 = vdwg.mxu0
  %v278 = vsel %vm62, 0.0, 0
  %280 = vmatprep.subr.mxu0 0.0
  %281 = vmatpush1.msra.mxu0 0.0
  %282 = vmatprep.subr.mxu0 0.0
  %283 = vmatpush1.msra.mxu0 0.0
  %284 = vmatprep.subr.mxu0 0.0
  %285 = vmatpush1.msra.mxu0 0.0
  %286 = vmatprep.subr.mxu0 0.0
  %287 = vmatpush1.msra.mxu0 0.0
  %288 = vmatprep.subr.mxu0 0.0
  %289 = vmatpush1.msra.mxu0 0.0
  %290 = vmatprep.subr.mxu0 0.0
  %291 = vmatpush1.msra.mxu0 0.0
  %292 = vmatprep.subr.mxu0 0.0
  %293 = vmatpush1.msra.mxu0 0.0
  %294 = vmatprep.subr.mxu0 0.0
  %295 = vmatpush1.msra.mxu0 0.0
  %296 = vmatprep.subr.mxu0 0.0
  %297 = vmatpush1.msra.mxu0 0.0
  %298 = vmatprep.subr.mxu0 0.0
  %299 = vmatpush1.msra.mxu0 0.0
  %300 = vmatprep.subr.mxu0 0.0
  %301 = vmatpush1.msra.mxu0 0.0
  %302 = vmatprep.subr.mxu0 0.0
  %303 = vmatpush1.msra.mxu0 0.0
  %304 = vmatprep.subr.mxu0 0.0
  %305 = vmatpush1.msra.mxu0 %v42
  %306 = vmatprep.subr.mxu0 0.0
  %307 = vmatpush1.msra.mxu0 %v41
  %308 = vmatprep.subr.mxu0 0.0
  %309 = vmatpush1.msra.mxu0 %v40
  %310 = vmatprep.subr.mxu0 0.0
  %311 = vmatpush1.msra.mxu0 %v39
  %312 = vmatprep.subr.mxu0 0.0
  %313 = vmatpush2.msra.mxu0 0.0
  %314 = vmatprep.subr.mxu0 0.0
  %315 = vmatpush2.msra.mxu0 0.0
  %316 = vmatprep.subr.mxu0 0.0
  %317 = vmatpush2.msra.mxu0 0.0
  %318 = vmatprep.subr.mxu0 0.0
  %319 = vmatpush2.msra.mxu0 0.0
  %320 = vmatprep.subr.mxu0 0.0
  %321 = vmatpush2.msra.mxu0 0.0
  %322 = vmatprep.subr.mxu0 0.0
  %323 = vmatpush2.msra.mxu0 0.0
  %324 = vmatprep.subr.mxu0 0.0
  %325 = vmatpush2.msra.mxu0 0.0
  %326 = vmatprep.subr.mxu0 0.0
  %327 = vmatpush2.msra.mxu0 0.0
  %328 = vmatprep.subr.mxu0 0.0
  %329 = vmatpush2.msra.mxu0 0.0
  %330 = vmatprep.subr.mxu0 0.0
  %331 = vmatpush2.msra.mxu0 0.0
  %332 = vmatprep.subr.mxu0 0.0
  %333 = vmatpush2.msra.mxu0 0.0
  %334 = vmatprep.subr.mxu0 0.0
  %335 = vmatpush2.msra.mxu0 0.0
  %336 = vmatprep.subr.mxu0 0.0
  %337 = vmatpush2.msra.mxu0 0.0
  %338 = vmatprep.subr.mxu0 0.0
  %339 = vmatpush2.msra.mxu0 0.0
  %340 = vmatprep.subr.mxu0 0.0
  %341 = vmatpush2.msra.mxu0 0.0
  %342 = vmatprep.subr.mxu0 0.0
  %343 = vmatpush2.msra.mxu0 0.0
  %344 = vmatprep.mubr.f32.mxu0 0.0
  %345 = vmatmul.mubr.f32.gmra.mxu0 %v278
  %v346 = vpop.f32.mrf.mxu0
  %v347 = vadd.f32 0.0, %v346
  %v348 = vpop.f32.mrf.mxu0
  %349 = vdwg.mxu0
  %v350 = vadd.f32 %v154, %v347
  %v351 = vxor.u32 %v350, 2147483648
  %v352 = vmul.f32 %v351, 1.442695
  %v353 = vpow.pop %v352
  %v354 = vadd.f32 %v353, 1.0
  %v355 = vrcp.pop %v354
  %v356 = vmul.f32 1.0, %v355
  %v357 = vtanh.pop %v350
  %v358 = vmul.f32 %v356, 0.0
  %360 = vrot.lane.b32.xlu0 %v357, 64
  %v361 = vpop.permute.xlu0 %360
  %v363 = vmul.f32 %v356, %v361
  %365 = vrot.lane.b32.xlu0 %v363, 32
  %v366 = vpop.permute.xlu0 %365
  %v368 = vadd.f32 %v358, %v366
  %v369 = vtanh.pop %v368
  %371 = vrot.lane.b32.xlu0 %v369, 64
  %v372 = vpop.permute.xlu0 %371
  %v374 = vmul.f32 %v356, %v372
  %vm375 = vcmp.gt.s32.totalorder %v38, 0
  %v376 = vsel %vm375, 1, 0
  %377 = vset.pattern.permute.xlu0 0
  %378 = vperm.xlu0 %377, %v376
  %v379 = vpop.permute.xlu0 %378
  %vm380 = vcmp.eq.s32.totalorder %v379, 1
  %v381 = vsel %vm380, %v374, 0.0
  %v382 = vsel %vm380, %v368, 0.0
  %384 = vrot.lane.b32.xlu0 %v381, 32
  %v385 = vpop.permute.xlu0 %384
  %v386 = vsel %vm62, %v385, 0
  %388 = vmatprep.subr.mxu0 0.0
  %389 = vmatpush1.msra.mxu0 0.0
  %390 = vmatprep.subr.mxu0 0.0
  %391 = vmatpush1.msra.mxu0 0.0
  %392 = vmatprep.subr.mxu0 0.0
  %393 = vmatpush1.msra.mxu0 0.0
  %394 = vmatprep.subr.mxu0 0.0
  %395 = vmatpush1.msra.mxu0 0.0
  %396 = vmatprep.subr.mxu0 0.0
  %397 = vmatpush1.msra.mxu0 0.0
  %398 = vmatprep.subr.mxu0 0.0
  %399 = vmatpush1.msra.mxu0 0.0
  %400 = vmatprep.subr.mxu0 0.0
  %401 = vmatpush1.msra.mxu0 0.0
  %402 = vmatprep.subr.mxu0 0.0
  %403 = vmatpush1.msra.mxu0 0.0
  %404 = vmatprep.subr.mxu0 0.0
  %405 = vmatpush1.msra.mxu0 0.0
  %406 = vmatprep.subr.mxu0 0.0
  %407 = vmatpush1.msra.mxu0 0.0
  %408 = vmatprep.subr.mxu0 0.0
  %409 = vmatpush1.msra.mxu0 0.0
  %410 = vmatprep.subr.mxu0 0.0
  %411 = vmatpush1.msra.mxu0 0.0
  %412 = vmatprep.subr.mxu0 0.0
  %413 = vmatpush1.msra.mxu0 %v42
  %414 = vmatprep.subr.mxu0 0.0
  %415 = vmatpush1.msra.mxu0 %v41
  %416 = vmatprep.subr.mxu0 0.0
  %417 = vmatpush1.msra.mxu0 %v40
  %418 = vmatprep.subr.mxu0 0.0
  %419 = vmatpush1.msra.mxu0 %v39
  %420 = vmatprep.subr.mxu0 0.0
  %421 = vmatpush2.msra.mxu0 0.0
  %422 = vmatprep.subr.mxu0 0.0
  %423 = vmatpush2.msra.mxu0 0.0
  %424 = vmatprep.subr.mxu0 0.0
  %425 = vmatpush2.msra.mxu0 0.0
  %426 = vmatprep.subr.mxu0 0.0
  %427 = vmatpush2.msra.mxu0 0.0
  %428 = vmatprep.subr.mxu0 0.0
  %429 = vmatpush2.msra.mxu0 0.0
  %430 = vmatprep.subr.mxu0 0.0
  %431 = vmatpush2.msra.mxu0 0.0
  %432 = vmatprep.subr.mxu0 0.0
  %433 = vmatpush2.msra.mxu0 0.0
  %434 = vmatprep.subr.mxu0 0.0
  %435 = vmatpush2.msra.mxu0 0.0
  %436 = vmatprep.subr.mxu0 0.0
  %437 = vmatpush2.msra.mxu0 0.0
  %438 = vmatprep.subr.mxu0 0.0
  %439 = vmatpush2.msra.mxu0 0.0
  %440 = vmatprep.subr.mxu0 0.0
  %441 = vmatpush2.msra.mxu0 0.0
  %442 = vmatprep.subr.mxu0 0.0
  %443 = vmatpush2.msra.mxu0 0.0
  %444 = vmatprep.subr.mxu0 0.0
  %445 = vmatpush2.msra.mxu0 0.0
  %446 = vmatprep.subr.mxu0 0.0
  %447 = vmatpush2.msra.mxu0 0.0
  %448 = vmatprep.subr.mxu0 0.0
  %449 = vmatpush2.msra.mxu0 0.0
  %450 = vmatprep.subr.mxu0 0.0
  %451 = vmatpush2.msra.mxu0 0.0
  %452 = vmatprep.mubr.f32.mxu0 0.0
  %453 = vmatmul.mubr.f32.gmra.mxu0 %v386
  %v454 = vpop.f32.mrf.mxu0
  %v455 = vadd.f32 0.0, %v454
  %v456 = vpop.f32.mrf.mxu0
  %457 = vdwg.mxu0
  %v458 = vadd.f32 %v159, %v455
  %v459 = vxor.u32 %v458, 2147483648
  %v460 = vmul.f32 %v459, 1.442695
  %v461 = vpow.pop %v460
  %v462 = vadd.f32 %v461, 1.0
  %v463 = vrcp.pop %v462
  %v464 = vmul.f32 1.0, %v463
  %v465 = vtanh.pop %v458
  %v466 = vmul.f32 %v464, %v382
  %468 = vrot.lane.b32.xlu0 %v465, 64
  %v469 = vpop.permute.xlu0 %468
  %v471 = vmul.f32 %v464, %v469
  %473 = vrot.lane.b32.xlu0 %v471, 32
  %v474 = vpop.permute.xlu0 %473
  %v476 = vadd.f32 %v466, %v474
  %v477 = vtanh.pop %v476
  %479 = vrot.lane.b32.xlu0 %v477, 64
  %v480 = vpop.permute.xlu0 %479
  %v482 = vmul.f32 %v464, %v480
  %vm483 = vcmp.gt.s32.totalorder %v38, 1
  %v484 = vsel %vm483, 1, 0
  %485 = vset.pattern.permute.xlu0 0
  %486 = vperm.xlu0 %485, %v484
  %v487 = vpop.permute.xlu0 %486
  %vm488 = vcmp.eq.s32.totalorder %v487, 1
  %v489 = vsel %vm488, %v482, %v381
  %v490 = vsel %vm488, %v476, %v382
  %492 = vrot.lane.b32.xlu0 %v489, 32
  %v493 = vpop.permute.xlu0 %492
  %v494 = vsel %vm62, %v493, 0
  %496 = vmatprep.subr.mxu0 0.0
  %497 = vmatpush1.msra.mxu0 0.0
  %498 = vmatprep.subr.mxu0 0.0
  %499 = vmatpush1.msra.mxu0 0.0
  %500 = vmatprep.subr.mxu0 0.0
  %501 = vmatpush1.msra.mxu0 0.0
  %502 = vmatprep.subr.mxu0 0.0
  %503 = vmatpush1.msra.mxu0 0.0
  %504 = vmatprep.subr.mxu0 0.0
  %505 = vmatpush1.msra.mxu0 0.0
  %506 = vmatprep.subr.mxu0 0.0
  %507 = vmatpush1.msra.mxu0 0.0
  %508 = vmatprep.subr.mxu0 0.0
  %509 = vmatpush1.msra.mxu0 0.0
  %510 = vmatprep.subr.mxu0 0.0
  %511 = vmatpush1.msra.mxu0 0.0
  %512 = vmatprep.subr.mxu0 0.0
  %513 = vmatpush1.msra.mxu0 0.0
  %514 = vmatprep.subr.mxu0 0.0
  %515 = vmatpush1.msra.mxu0 0.0
  %516 = vmatprep.subr.mxu0 0.0
  %517 = vmatpush1.msra.mxu0 0.0
  %518 = vmatprep.subr.mxu0 0.0
  %519 = vmatpush1.msra.mxu0 0.0
  %520 = vmatprep.subr.mxu0 0.0
  %521 = vmatpush1.msra.mxu0 %v42
  %522 = vmatprep.subr.mxu0 0.0
  %523 = vmatpush1.msra.mxu0 %v41
  %524 = vmatprep.subr.mxu0 0.0
  %525 = vmatpush1.msra.mxu0 %v40
  %526 = vmatprep.subr.mxu0 0.0
  %527 = vmatpush1.msra.mxu0 %v39
  %528 = vmatprep.subr.mxu0 0.0
  %529 = vmatpush2.msra.mxu0 0.0
  %530 = vmatprep.subr.mxu0 0.0
  %531 = vmatpush2.msra.mxu0 0.0
  %532 = vmatprep.subr.mxu0 0.0
  %533 = vmatpush2.msra.mxu0 0.0
  %534 = vmatprep.subr.mxu0 0.0
  %535 = vmatpush2.msra.mxu0 0.0
  %536 = vmatprep.subr.mxu0 0.0
  %537 = vmatpush2.msra.mxu0 0.0
  %538 = vmatprep.subr.mxu0 0.0
  %539 = vmatpush2.msra.mxu0 0.0
  %540 = vmatprep.subr.mxu0 0.0
  %541 = vmatpush2.msra.mxu0 0.0
  %542 = vmatprep.subr.mxu0 0.0
  %543 = vmatpush2.msra.mxu0 0.0
  %544 = vmatprep.subr.mxu0 0.0
  %545 = vmatpush2.msra.mxu0 0.0
  %546 = vmatprep.subr.mxu0 0.0
  %547 = vmatpush2.msra.mxu0 0.0
  %548 = vmatprep.subr.mxu0 0.0
  %549 = vmatpush2.msra.mxu0 0.0
  %550 = vmatprep.subr.mxu0 0.0
  %551 = vmatpush2.msra.mxu0 0.0
  %552 = vmatprep.subr.mxu0 0.0
  %553 = vmatpush2.msra.mxu0 0.0
  %554 = vmatprep.subr.mxu0 0.0
  %555 = vmatpush2.msra.mxu0 0.0
  %556 = vmatprep.subr.mxu0 0.0
  %557 = vmatpush2.msra.mxu0 0.0
  %558 = vmatprep.subr.mxu0 0.0
  %559 = vmatpush2.msra.mxu0 0.0
  %560 = vmatprep.mubr.f32.mxu0 0.0
  %561 = vmatmul.mubr.f32.gmra.mxu0 %v494
  %v562 = vpop.f32.mrf.mxu0
  %v563 = vadd.f32 0.0, %v562
  %v564 = vpop.f32.mrf.mxu0
  %565 = vdwg.mxu0
  %v566 = vadd.f32 %v164, %v563
  %v567 = vxor.u32 %v566, 2147483648
  %v568 = vmul.f32 %v567, 1.442695
  %v569 = vpow.pop %v568
  %v570 = vadd.f32 %v569, 1.0
  %v571 = vrcp.pop %v570
  %v572 = vmul.f32 1.0, %v571
  %v573 = vtanh.pop %v566
  %v574 = vmul.f32 %v572, %v490
  %576 = vrot.lane.b32.xlu0 %v573, 64
  %v577 = vpop.permute.xlu0 %576
  %v579 = vmul.f32 %v572, %v577
  %581 = vrot.lane.b32.xlu0 %v579, 32
  %v582 = vpop.permute.xlu0 %581
  %v584 = vadd.f32 %v574, %v582
  %v585 = vtanh.pop %v584
  %587 = vrot.lane.b32.xlu0 %v585, 64
  %v588 = vpop.permute.xlu0 %587
  %v590 = vmul.f32 %v572, %v588
  %vm591 = vcmp.gt.s32.totalorder %v38, 2
  %v592 = vsel %vm591, 1, 0
  %593 = vset.pattern.permute.xlu0 0
  %594 = vperm.xlu0 %593, %v592
  %v595 = vpop.permute.xlu0 %594
  %vm596 = vcmp.eq.s32.totalorder %v595, 1
  %v597 = vsel %vm596, %v590, %v489
  %v598 = vsel %vm596, %v584, %v490
  %600 = vrot.lane.b32.xlu0 %v597, 32
  %v601 = vpop.permute.xlu0 %600
  %v602 = vsel %vm62, %v601, 0
  %604 = vmatprep.subr.mxu0 0.0
  %605 = vmatpush1.msra.mxu0 0.0
  %606 = vmatprep.subr.mxu0 0.0
  %607 = vmatpush1.msra.mxu0 0.0
  %608 = vmatprep.subr.mxu0 0.0
  %609 = vmatpush1.msra.mxu0 0.0
  %610 = vmatprep.subr.mxu0 0.0
  %611 = vmatpush1.msra.mxu0 0.0
  %612 = vmatprep.subr.mxu0 0.0
  %613 = vmatpush1.msra.mxu0 0.0
  %614 = vmatprep.subr.mxu0 0.0
  %615 = vmatpush1.msra.mxu0 0.0
  %616 = vmatprep.subr.mxu0 0.0
  %617 = vmatpush1.msra.mxu0 0.0
  %618 = vmatprep.subr.mxu0 0.0
  %619 = vmatpush1.msra.mxu0 0.0
  %620 = vmatprep.subr.mxu0 0.0
  %621 = vmatpush1.msra.mxu0 0.0
  %622 = vmatprep.subr.mxu0 0.0
  %623 = vmatpush1.msra.mxu0 0.0
  %624 = vmatprep.subr.mxu0 0.0
  %625 = vmatpush1.msra.mxu0 0.0
  %626 = vmatprep.subr.mxu0 0.0
  %627 = vmatpush1.msra.mxu0 0.0
  %628 = vmatprep.subr.mxu0 0.0
  %629 = vmatpush1.msra.mxu0 %v42
  %630 = vmatprep.subr.mxu0 0.0
  %631 = vmatpush1.msra.mxu0 %v41
  %632 = vmatprep.subr.mxu0 0.0
  %633 = vmatpush1.msra.mxu0 %v40
  %634 = vmatprep.subr.mxu0 0.0
  %635 = vmatpush1.msra.mxu0 %v39
  %636 = vmatprep.subr.mxu0 0.0
  %637 = vmatpush2.msra.mxu0 0.0
  %638 = vmatprep.subr.mxu0 0.0
  %639 = vmatpush2.msra.mxu0 0.0
  %640 = vmatprep.subr.mxu0 0.0
  %641 = vmatpush2.msra.mxu0 0.0
  %642 = vmatprep.subr.mxu0 0.0
  %643 = vmatpush2.msra.mxu0 0.0
  %644 = vmatprep.subr.mxu0 0.0
  %645 = vmatpush2.msra.mxu0 0.0
  %646 = vmatprep.subr.mxu0 0.0
  %647 = vmatpush2.msra.mxu0 0.0
  %648 = vmatprep.subr.mxu0 0.0
  %649 = vmatpush2.msra.mxu0 0.0
  %650 = vmatprep.subr.mxu0 0.0
  %651 = vmatpush2.msra.mxu0 0.0
  %652 = vmatprep.subr.mxu0 0.0
  %653 = vmatpush2.msra.mxu0 0.0
  %654 = vmatprep.subr.mxu0 0.0
  %655 = vmatpush2.msra.mxu0 0.0
  %656 = vmatprep.subr.mxu0 0.0
  %657 = vmatpush2.msra.mxu0 0.0
  %658 = vmatprep.subr.mxu0 0.0
  %659 = vmatpush2.msra.mxu0 0.0
  %660 = vmatprep.subr.mxu0 0.0
  %661 = vmatpush2.msra.mxu0 0.0
  %662 = vmatprep.subr.mxu0 0.0
  %663 = vmatpush2.msra.mxu0 0.0
  %664 = vmatprep.subr.mxu0 0.0
  %665 = vmatpush2.msra.mxu0 0.0
  %666 = vmatprep.subr.mxu0 0.0
  %667 = vmatpush2.msra.mxu0 0.0
  %668 = vmatprep.mubr.f32.mxu0 0.0
  %669 = vmatmul.mubr.f32.gmra.mxu0 %v602
  %v670 = vpop.f32.mrf.mxu0
  %v671 = vadd.f32 0.0, %v670
  %v672 = vpop.f32.mrf.mxu0
  %673 = vdwg.mxu0
  %v674 = vadd.f32 %v169, %v671
  %v675 = vxor.u32 %v674, 2147483648
  %v676 = vmul.f32 %v675, 1.442695
  %v677 = vpow.pop %v676
  %v678 = vadd.f32 %v677, 1.0
  %v679 = vrcp.pop %v678
  %v680 = vmul.f32 1.0, %v679
  %v681 = vtanh.pop %v674
  %v682 = vmul.f32 %v680, %v598
  %684 = vrot.lane.b32.xlu0 %v681, 64
  %v685 = vpop.permute.xlu0 %684
  %v687 = vmul.f32 %v680, %v685
  %689 = vrot.lane.b32.xlu0 %v687, 32
  %v690 = vpop.permute.xlu0 %689
  %v692 = vadd.f32 %v682, %v690
  %v693 = vtanh.pop %v692
  %695 = vrot.lane.b32.xlu0 %v693, 64
  %v696 = vpop.permute.xlu0 %695
  %v698 = vmul.f32 %v680, %v696
  %vm699 = vcmp.gt.s32.totalorder %v38, 3
  %v700 = vsel %vm699, 1, 0
  %701 = vset.pattern.permute.xlu0 0
  %702 = vperm.xlu0 %701, %v700
  %v703 = vpop.permute.xlu0 %702
  %vm704 = vcmp.eq.s32.totalorder %v703, 1
  %v705 = vsel %vm704, %v698, %v597
  %v706 = vsel %vm704, %v692, %v598
  %708 = vrot.lane.b32.xlu0 %v705, 32
  %v709 = vpop.permute.xlu0 %708
  %v710 = vsel %vm62, %v709, 0
  %712 = vmatprep.subr.mxu0 0.0
  %713 = vmatpush1.msra.mxu0 0.0
  %714 = vmatprep.subr.mxu0 0.0
  %715 = vmatpush1.msra.mxu0 0.0
  %716 = vmatprep.subr.mxu0 0.0
  %717 = vmatpush1.msra.mxu0 0.0
  %718 = vmatprep.subr.mxu0 0.0
  %719 = vmatpush1.msra.mxu0 0.0
  %720 = vmatprep.subr.mxu0 0.0
  %721 = vmatpush1.msra.mxu0 0.0
  %722 = vmatprep.subr.mxu0 0.0
  %723 = vmatpush1.msra.mxu0 0.0
  %724 = vmatprep.subr.mxu0 0.0
  %725 = vmatpush1.msra.mxu0 0.0
  %726 = vmatprep.subr.mxu0 0.0
  %727 = vmatpush1.msra.mxu0 0.0
  %728 = vmatprep.subr.mxu0 0.0
  %729 = vmatpush1.msra.mxu0 0.0
  %730 = vmatprep.subr.mxu0 0.0
  %731 = vmatpush1.msra.mxu0 0.0
  %732 = vmatprep.subr.mxu0 0.0
  %733 = vmatpush1.msra.mxu0 0.0
  %734 = vmatprep.subr.mxu0 0.0
  %735 = vmatpush1.msra.mxu0 0.0
  %736 = vmatprep.subr.mxu0 0.0
  %737 = vmatpush1.msra.mxu0 %v42
  %738 = vmatprep.subr.mxu0 0.0
  %739 = vmatpush1.msra.mxu0 %v41
  %740 = vmatprep.subr.mxu0 0.0
  %741 = vmatpush1.msra.mxu0 %v40
  %742 = vmatprep.subr.mxu0 0.0
  %743 = vmatpush1.msra.mxu0 %v39
  %744 = vmatprep.subr.mxu0 0.0
  %745 = vmatpush2.msra.mxu0 0.0
  %746 = vmatprep.subr.mxu0 0.0
  %747 = vmatpush2.msra.mxu0 0.0
  %748 = vmatprep.subr.mxu0 0.0
  %749 = vmatpush2.msra.mxu0 0.0
  %750 = vmatprep.subr.mxu0 0.0
  %751 = vmatpush2.msra.mxu0 0.0
  %752 = vmatprep.subr.mxu0 0.0
  %753 = vmatpush2.msra.mxu0 0.0
  %754 = vmatprep.subr.mxu0 0.0
  %755 = vmatpush2.msra.mxu0 0.0
  %756 = vmatprep.subr.mxu0 0.0
  %757 = vmatpush2.msra.mxu0 0.0
  %758 = vmatprep.subr.mxu0 0.0
  %759 = vmatpush2.msra.mxu0 0.0
  %760 = vmatprep.subr.mxu0 0.0
  %761 = vmatpush2.msra.mxu0 0.0
  %762 = vmatprep.subr.mxu0 0.0
  %763 = vmatpush2.msra.mxu0 0.0
  %764 = vmatprep.subr.mxu0 0.0
  %765 = vmatpush2.msra.mxu0 0.0
  %766 = vmatprep.subr.mxu0 0.0
  %767 = vmatpush2.msra.mxu0 0.0
  %768 = vmatprep.subr.mxu0 0.0
  %769 = vmatpush2.msra.mxu0 0.0
  %770 = vmatprep.subr.mxu0 0.0
  %771 = vmatpush2.msra.mxu0 0.0
  %772 = vmatprep.subr.mxu0 0.0
  %773 = vmatpush2.msra.mxu0 0.0
  %774 = vmatprep.subr.mxu0 0.0
  %775 = vmatpush2.msra.mxu0 0.0
  %776 = vmatprep.mubr.f32.mxu0 0.0
  %777 = vmatmul.mubr.f32.gmra.mxu0 %v710
  %v778 = vpop.f32.mrf.mxu0
  %v779 = vadd.f32 0.0, %v778
  %v780 = vpop.f32.mrf.mxu0
  %781 = vdwg.mxu0
  %v782 = vadd.f32 %v174, %v779
  %v783 = vxor.u32 %v782, 2147483648
  %v784 = vmul.f32 %v783, 1.442695
  %v785 = vpow.pop %v784
  %v786 = vadd.f32 %v785, 1.0
  %v787 = vrcp.pop %v786
  %v788 = vmul.f32 1.0, %v787
  %v789 = vtanh.pop %v782
  %v790 = vmul.f32 %v788, %v706
  %792 = vrot.lane.b32.xlu0 %v789, 64
  %v793 = vpop.permute.xlu0 %792
  %v795 = vmul.f32 %v788, %v793
  %797 = vrot.lane.b32.xlu0 %v795, 32
  %v798 = vpop.permute.xlu0 %797
  %v800 = vadd.f32 %v790, %v798
  %v801 = vtanh.pop %v800
  %803 = vrot.lane.b32.xlu0 %v801, 64
  %v804 = vpop.permute.xlu0 %803
  %v806 = vmul.f32 %v788, %v804
  %vm807 = vcmp.gt.s32.totalorder %v38, 4
  %v808 = vsel %vm807, 1, 0
  %809 = vset.pattern.permute.xlu0 0
  %810 = vperm.xlu0 %809, %v808
  %v811 = vpop.permute.xlu0 %810
  %vm812 = vcmp.eq.s32.totalorder %v811, 1
  %v813 = vsel %vm812, %v806, %v705
  %v814 = vsel %vm812, %v800, %v706
  %816 = vrot.lane.b32.xlu0 %v813, 32
  %v817 = vpop.permute.xlu0 %816
  %v818 = vsel %vm62, %v817, 0
  %820 = vmatprep.subr.mxu0 0.0
  %821 = vmatpush1.msra.mxu0 0.0
  %822 = vmatprep.subr.mxu0 0.0
  %823 = vmatpush1.msra.mxu0 0.0
  %824 = vmatprep.subr.mxu0 0.0
  %825 = vmatpush1.msra.mxu0 0.0
  %826 = vmatprep.subr.mxu0 0.0
  %827 = vmatpush1.msra.mxu0 0.0
  %828 = vmatprep.subr.mxu0 0.0
  %829 = vmatpush1.msra.mxu0 0.0
  %830 = vmatprep.subr.mxu0 0.0
  %831 = vmatpush1.msra.mxu0 0.0
  %832 = vmatprep.subr.mxu0 0.0
  %833 = vmatpush1.msra.mxu0 0.0
  %834 = vmatprep.subr.mxu0 0.0
  %835 = vmatpush1.msra.mxu0 0.0
  %836 = vmatprep.subr.mxu0 0.0
  %837 = vmatpush1.msra.mxu0 0.0
  %838 = vmatprep.subr.mxu0 0.0
  %839 = vmatpush1.msra.mxu0 0.0
  %840 = vmatprep.subr.mxu0 0.0
  %841 = vmatpush1.msra.mxu0 0.0
  %842 = vmatprep.subr.mxu0 0.0
  %843 = vmatpush1.msra.mxu0 0.0
  %844 = vmatprep.subr.mxu0 0.0
  %845 = vmatpush1.msra.mxu0 %v42
  %846 = vmatprep.subr.mxu0 0.0
  %847 = vmatpush1.msra.mxu0 %v41
  %848 = vmatprep.subr.mxu0 0.0
  %849 = vmatpush1.msra.mxu0 %v40
  %850 = vmatprep.subr.mxu0 0.0
  %851 = vmatpush1.msra.mxu0 %v39
  %852 = vmatprep.subr.mxu0 0.0
  %853 = vmatpush2.msra.mxu0 0.0
  %854 = vmatprep.subr.mxu0 0.0
  %855 = vmatpush2.msra.mxu0 0.0
  %856 = vmatprep.subr.mxu0 0.0
  %857 = vmatpush2.msra.mxu0 0.0
  %858 = vmatprep.subr.mxu0 0.0
  %859 = vmatpush2.msra.mxu0 0.0
  %860 = vmatprep.subr.mxu0 0.0
  %861 = vmatpush2.msra.mxu0 0.0
  %862 = vmatprep.subr.mxu0 0.0
  %863 = vmatpush2.msra.mxu0 0.0
  %864 = vmatprep.subr.mxu0 0.0
  %865 = vmatpush2.msra.mxu0 0.0
  %866 = vmatprep.subr.mxu0 0.0
  %867 = vmatpush2.msra.mxu0 0.0
  %868 = vmatprep.subr.mxu0 0.0
  %869 = vmatpush2.msra.mxu0 0.0
  %870 = vmatprep.subr.mxu0 0.0
  %871 = vmatpush2.msra.mxu0 0.0
  %872 = vmatprep.subr.mxu0 0.0
  %873 = vmatpush2.msra.mxu0 0.0
  %874 = vmatprep.subr.mxu0 0.0
  %875 = vmatpush2.msra.mxu0 0.0
  %876 = vmatprep.subr.mxu0 0.0
  %877 = vmatpush2.msra.mxu0 0.0
  %878 = vmatprep.subr.mxu0 0.0
  %879 = vmatpush2.msra.mxu0 0.0
  %880 = vmatprep.subr.mxu0 0.0
  %881 = vmatpush2.msra.mxu0 0.0
  %882 = vmatprep.subr.mxu0 0.0
  %883 = vmatpush2.msra.mxu0 0.0
  %884 = vmatprep.mubr.f32.mxu0 0.0
  %885 = vmatmul.mubr.f32.gmra.mxu0 %v818
  %v886 = vpop.f32.mrf.mxu0
  %v887 = vadd.f32 0.0, %v886
  %v888 = vpop.f32.mrf.mxu0
  %889 = vdwg.mxu0
  %v890 = vadd.f32 %v179, %v887
  %v891 = vxor.u32 %v890, 2147483648
  %v892 = vmul.f32 %v891, 1.442695
  %v893 = vpow.pop %v892
  %v894 = vadd.f32 %v893, 1.0
  %v895 = vrcp.pop %v894
  %v896 = vmul.f32 1.0, %v895
  %v897 = vtanh.pop %v890
  %v898 = vmul.f32 %v896, %v814
  %900 = vrot.lane.b32.xlu0 %v897, 64
  %v901 = vpop.permute.xlu0 %900
  %v903 = vmul.f32 %v896, %v901
  %905 = vrot.lane.b32.xlu0 %v903, 32
  %v906 = vpop.permute.xlu0 %905
  %v908 = vadd.f32 %v898, %v906
  %v909 = vtanh.pop %v908
  %911 = vrot.lane.b32.xlu0 %v909, 64
  %v912 = vpop.permute.xlu0 %911
  %v914 = vmul.f32 %v896, %v912
  %vm915 = vcmp.gt.s32.totalorder %v38, 5
  %v916 = vsel %vm915, 1, 0
  %917 = vset.pattern.permute.xlu0 0
  %918 = vperm.xlu0 %917, %v916
  %v919 = vpop.permute.xlu0 %918
  %vm920 = vcmp.eq.s32.totalorder %v919, 1
  %v921 = vsel %vm920, %v914, %v813
  %v922 = vsel %vm920, %v908, %v814
  %924 = vrot.lane.b32.xlu0 %v921, 32
  %v925 = vpop.permute.xlu0 %924
  %v926 = vsel %vm62, %v925, 0
  %928 = vmatprep.subr.mxu0 0.0
  %929 = vmatpush1.msra.mxu0 0.0
  %930 = vmatprep.subr.mxu0 0.0
  %931 = vmatpush1.msra.mxu0 0.0
  %932 = vmatprep.subr.mxu0 0.0
  %933 = vmatpush1.msra.mxu0 0.0
  %934 = vmatprep.subr.mxu0 0.0
  %935 = vmatpush1.msra.mxu0 0.0
  %936 = vmatprep.subr.mxu0 0.0
  %937 = vmatpush1.msra.mxu0 0.0
  %938 = vmatprep.subr.mxu0 0.0
  %939 = vmatpush1.msra.mxu0 0.0
  %940 = vmatprep.subr.mxu0 0.0
  %941 = vmatpush1.msra.mxu0 0.0
  %942 = vmatprep.subr.mxu0 0.0
  %943 = vmatpush1.msra.mxu0 0.0
  %944 = vmatprep.subr.mxu0 0.0
  %945 = vmatpush1.msra.mxu0 0.0
  %946 = vmatprep.subr.mxu0 0.0
  %947 = vmatpush1.msra.mxu0 0.0
  %948 = vmatprep.subr.mxu0 0.0
  %949 = vmatpush1.msra.mxu0 0.0
  %950 = vmatprep.subr.mxu0 0.0
  %951 = vmatpush1.msra.mxu0 0.0
  %952 = vmatprep.subr.mxu0 0.0
  %953 = vmatpush1.msra.mxu0 %v42
  %954 = vmatprep.subr.mxu0 0.0
  %955 = vmatpush1.msra.mxu0 %v41
  %956 = vmatprep.subr.mxu0 0.0
  %957 = vmatpush1.msra.mxu0 %v40
  %958 = vmatprep.subr.mxu0 0.0
  %959 = vmatpush1.msra.mxu0 %v39
  %960 = vmatprep.subr.mxu0 0.0
  %961 = vmatpush2.msra.mxu0 0.0
  %962 = vmatprep.subr.mxu0 0.0
  %963 = vmatpush2.msra.mxu0 0.0
  %964 = vmatprep.subr.mxu0 0.0
  %965 = vmatpush2.msra.mxu0 0.0
  %966 = vmatprep.subr.mxu0 0.0
  %967 = vmatpush2.msra.mxu0 0.0
  %968 = vmatprep.subr.mxu0 0.0
  %969 = vmatpush2.msra.mxu0 0.0
  %970 = vmatprep.subr.mxu0 0.0
  %971 = vmatpush2.msra.mxu0 0.0
  %972 = vmatprep.subr.mxu0 0.0
  %973 = vmatpush2.msra.mxu0 0.0
  %974 = vmatprep.subr.mxu0 0.0
  %975 = vmatpush2.msra.mxu0 0.0
  %976 = vmatprep.subr.mxu0 0.0
  %977 = vmatpush2.msra.mxu0 0.0
  %978 = vmatprep.subr.mxu0 0.0
  %979 = vmatpush2.msra.mxu0 0.0
  %980 = vmatprep.subr.mxu0 0.0
  %981 = vmatpush2.msra.mxu0 0.0
  %982 = vmatprep.subr.mxu0 0.0
  %983 = vmatpush2.msra.mxu0 0.0
  %984 = vmatprep.subr.mxu0 0.0
  %985 = vmatpush2.msra.mxu0 0.0
  %986 = vmatprep.subr.mxu0 0.0
  %987 = vmatpush2.msra.mxu0 0.0
  %988 = vmatprep.subr.mxu0 0.0
  %989 = vmatpush2.msra.mxu0 0.0
  %990 = vmatprep.subr.mxu0 0.0
  %991 = vmatpush2.msra.mxu0 0.0
  %992 = vmatprep.mubr.f32.mxu0 0.0
  %993 = vmatmul.mubr.f32.gmra.mxu0 %v926
  %v994 = vpop.f32.mrf.mxu0
  %v995 = vadd.f32 0.0, %v994
  %v996 = vpop.f32.mrf.mxu0
  %997 = vdwg.mxu0
  %v998 = vadd.f32 %v184, %v995
  %v999 = vxor.u32 %v998, 2147483648
  %v1000 = vmul.f32 %v999, 1.442695
  %v1001 = vpow.pop %v1000
  %v1002 = vadd.f32 %v1001, 1.0
  %v1003 = vrcp.pop %v1002
  %v1004 = vmul.f32 1.0, %v1003
  %v1005 = vtanh.pop %v998
  %v1006 = vmul.f32 %v1004, %v922
  %1008 = vrot.lane.b32.xlu0 %v1005, 64
  %v1009 = vpop.permute.xlu0 %1008
  %v1011 = vmul.f32 %v1004, %v1009
  %1013 = vrot.lane.b32.xlu0 %v1011, 32
  %v1014 = vpop.permute.xlu0 %1013
  %v1016 = vadd.f32 %v1006, %v1014
  %v1017 = vtanh.pop %v1016
  %1019 = vrot.lane.b32.xlu0 %v1017, 64
  %v1020 = vpop.permute.xlu0 %1019
  %v1022 = vmul.f32 %v1004, %v1020
  %vm1023 = vcmp.gt.s32.totalorder %v38, 6
  %v1024 = vsel %vm1023, 1, 0
  %1025 = vset.pattern.permute.xlu0 0
  %1026 = vperm.xlu0 %1025, %v1024
  %v1027 = vpop.permute.xlu0 %1026
  %vm1028 = vcmp.eq.s32.totalorder %v1027, 1
  %v1029 = vsel %vm1028, %v1022, %v921
  %v1030 = vsel %vm1028, %v1016, %v922
  %1032 = vrot.lane.b32.xlu0 %v1029, 32
  %v1033 = vpop.permute.xlu0 %1032
  %v1034 = vsel %vm62, %v1033, 0
  %1036 = vmatprep.subr.mxu0 0.0
  %1037 = vmatpush1.msra.mxu0 0.0
  %1038 = vmatprep.subr.mxu0 0.0
  %1039 = vmatpush1.msra.mxu0 0.0
  %1040 = vmatprep.subr.mxu0 0.0
  %1041 = vmatpush1.msra.mxu0 0.0
  %1042 = vmatprep.subr.mxu0 0.0
  %1043 = vmatpush1.msra.mxu0 0.0
  %1044 = vmatprep.subr.mxu0 0.0
  %1045 = vmatpush1.msra.mxu0 0.0
  %1046 = vmatprep.subr.mxu0 0.0
  %1047 = vmatpush1.msra.mxu0 0.0
  %1048 = vmatprep.subr.mxu0 0.0
  %1049 = vmatpush1.msra.mxu0 0.0
  %1050 = vmatprep.subr.mxu0 0.0
  %1051 = vmatpush1.msra.mxu0 0.0
  %1052 = vmatprep.subr.mxu0 0.0
  %1053 = vmatpush1.msra.mxu0 0.0
  %1054 = vmatprep.subr.mxu0 0.0
  %1055 = vmatpush1.msra.mxu0 0.0
  %1056 = vmatprep.subr.mxu0 0.0
  %1057 = vmatpush1.msra.mxu0 0.0
  %1058 = vmatprep.subr.mxu0 0.0
  %1059 = vmatpush1.msra.mxu0 0.0
  %1060 = vmatprep.subr.mxu0 0.0
  %1061 = vmatpush1.msra.mxu0 %v42
  %1062 = vmatprep.subr.mxu0 0.0
  %1063 = vmatpush1.msra.mxu0 %v41
  %1064 = vmatprep.subr.mxu0 0.0
  %1065 = vmatpush1.msra.mxu0 %v40
  %1066 = vmatprep.subr.mxu0 0.0
  %1067 = vmatpush1.msra.mxu0 %v39
  %1068 = vmatprep.subr.mxu0 0.0
  %1069 = vmatpush2.msra.mxu0 0.0
  %1070 = vmatprep.subr.mxu0 0.0
  %1071 = vmatpush2.msra.mxu0 0.0
  %1072 = vmatprep.subr.mxu0 0.0
  %1073 = vmatpush2.msra.mxu0 0.0
  %1074 = vmatprep.subr.mxu0 0.0
  %1075 = vmatpush2.msra.mxu0 0.0
  %1076 = vmatprep.subr.mxu0 0.0
  %1077 = vmatpush2.msra.mxu0 0.0
  %1078 = vmatprep.subr.mxu0 0.0
  %1079 = vmatpush2.msra.mxu0 0.0
  %1080 = vmatprep.subr.mxu0 0.0
  %1081 = vmatpush2.msra.mxu0 0.0
  %1082 = vmatprep.subr.mxu0 0.0
  %1083 = vmatpush2.msra.mxu0 0.0
  %1084 = vmatprep.subr.mxu0 0.0
  %1085 = vmatpush2.msra.mxu0 0.0
  %1086 = vmatprep.subr.mxu0 0.0
  %1087 = vmatpush2.msra.mxu0 0.0
  %1088 = vmatprep.subr.mxu0 0.0
  %1089 = vmatpush2.msra.mxu0 0.0
  %1090 = vmatprep.subr.mxu0 0.0
  %1091 = vmatpush2.msra.mxu0 0.0
  %1092 = vmatprep.subr.mxu0 0.0
  %1093 = vmatpush2.msra.mxu0 0.0
  %1094 = vmatprep.subr.mxu0 0.0
  %1095 = vmatpush2.msra.mxu0 0.0
  %1096 = vmatprep.subr.mxu0 0.0
  %1097 = vmatpush2.msra.mxu0 0.0
  %1098 = vmatprep.subr.mxu0 0.0
  %1099 = vmatpush2.msra.mxu0 0.0
  %1100 = vmatprep.mubr.f32.mxu0 0.0
  %1101 = vmatmul.mubr.f32.gmra.mxu0 %v1034
  %v1102 = vpop.f32.mrf.mxu0
  %v1103 = vadd.f32 0.0, %v1102
  %v1104 = vpop.f32.mrf.mxu0
  %1105 = vdwg.mxu0
  %v1106 = vadd.f32 %v189, %v1103
  %v1107 = vxor.u32 %v1106, 2147483648
  %v1108 = vmul.f32 %v1107, 1.442695
  %v1109 = vpow.pop %v1108
  %v1110 = vadd.f32 %v1109, 1.0
  %v1111 = vrcp.pop %v1110
  %v1112 = vmul.f32 1.0, %v1111
  %v1113 = vtanh.pop %v1106
  %v1114 = vmul.f32 %v1112, %v1030
  %1116 = vrot.lane.b32.xlu0 %v1113, 64
  %v1117 = vpop.permute.xlu0 %1116
  %v1119 = vmul.f32 %v1112, %v1117
  %1121 = vrot.lane.b32.xlu0 %v1119, 32
  %v1122 = vpop.permute.xlu0 %1121
  %v1124 = vadd.f32 %v1114, %v1122
  %v1125 = vtanh.pop %v1124
  %1127 = vrot.lane.b32.xlu0 %v1125, 64
  %v1128 = vpop.permute.xlu0 %1127
  %v1130 = vmul.f32 %v1112, %v1128
  %vm1131 = vcmp.gt.s32.totalorder %v38, 7
  %v1132 = vsel %vm1131, 1, 0
  %1133 = vset.pattern.permute.xlu0 0
  %1134 = vperm.xlu0 %1133, %v1132
  %v1135 = vpop.permute.xlu0 %1134
  %vm1136 = vcmp.eq.s32.totalorder %v1135, 1
  %v1137 = vsel %vm1136, %v1130, %v1029
  %v1138 = vld [vmem:[%s6] sm:$0xff]
  %v1139 = vld [vmem:[%s6 + $0x8] sm:$0xff]
  %v1140 = vld [vmem:[%s6 + $0x10] sm:$0xff]
  %v1141 = vld [vmem:[%s6 + $0x18] sm:$0xff]
  %1143 = vrot.lane.b32.xlu0 %v1137, 32
  %v1144 = vpop.permute.xlu0 %1143
  %v1145 = vsel %vm62, %v1144, 0
  %1147 = vmatprep.subr.mxu0 0.0
  %1148 = vmatpush1.msra.mxu0 0.0
  %1149 = vmatprep.subr.mxu0 0.0
  %1150 = vmatpush1.msra.mxu0 0.0
  %1151 = vmatprep.subr.mxu0 0.0
  %1152 = vmatpush1.msra.mxu0 0.0
  %1153 = vmatprep.subr.mxu0 0.0
  %1154 = vmatpush1.msra.mxu0 0.0
  %1155 = vmatprep.subr.mxu0 0.0
  %1156 = vmatpush1.msra.mxu0 0.0
  %1157 = vmatprep.subr.mxu0 0.0
  %1158 = vmatpush1.msra.mxu0 0.0
  %1159 = vmatprep.subr.mxu0 0.0
  %1160 = vmatpush1.msra.mxu0 0.0
  %1161 = vmatprep.subr.mxu0 0.0
  %1162 = vmatpush1.msra.mxu0 0.0
  %1163 = vmatprep.subr.mxu0 0.0
  %1164 = vmatpush1.msra.mxu0 0.0
  %1165 = vmatprep.subr.mxu0 0.0
  %1166 = vmatpush1.msra.mxu0 0.0
  %1167 = vmatprep.subr.mxu0 0.0
  %1168 = vmatpush1.msra.mxu0 0.0
  %1169 = vmatprep.subr.mxu0 0.0
  %1170 = vmatpush1.msra.mxu0 0.0
  %1171 = vmatprep.subr.mxu0 0.0
  %1172 = vmatpush1.msra.mxu0 %v1141
  %1173 = vmatprep.subr.mxu0 0.0
  %1174 = vmatpush1.msra.mxu0 %v1140
  %1175 = vmatprep.subr.mxu0 0.0
  %1176 = vmatpush1.msra.mxu0 %v1139
  %1177 = vmatprep.subr.mxu0 0.0
  %1178 = vmatpush1.msra.mxu0 %v1138
  %1179 = vmatprep.subr.mxu0 0.0
  %1180 = vmatpush2.msra.mxu0 0.0
  %1181 = vmatprep.subr.mxu0 0.0
  %1182 = vmatpush2.msra.mxu0 0.0
  %1183 = vmatprep.subr.mxu0 0.0
  %1184 = vmatpush2.msra.mxu0 0.0
  %1185 = vmatprep.subr.mxu0 0.0
  %1186 = vmatpush2.msra.mxu0 0.0
  %1187 = vmatprep.subr.mxu0 0.0
  %1188 = vmatpush2.msra.mxu0 0.0
  %1189 = vmatprep.subr.mxu0 0.0
  %1190 = vmatpush2.msra.mxu0 0.0
  %1191 = vmatprep.subr.mxu0 0.0
  %1192 = vmatpush2.msra.mxu0 0.0
  %1193 = vmatprep.subr.mxu0 0.0
  %1194 = vmatpush2.msra.mxu0 0.0
  %1195 = vmatprep.subr.mxu0 0.0
  %1196 = vmatpush2.msra.mxu0 0.0
  %1197 = vmatprep.subr.mxu0 0.0
  %1198 = vmatpush2.msra.mxu0 0.0
  %1199 = vmatprep.subr.mxu0 0.0
  %1200 = vmatpush2.msra.mxu0 0.0
  %1201 = vmatprep.subr.mxu0 0.0
  %1202 = vmatpush2.msra.mxu0 0.0
  %1203 = vmatprep.subr.mxu0 0.0
  %1204 = vmatpush2.msra.mxu0 0.0
  %1205 = vmatprep.subr.mxu0 0.0
  %1206 = vmatpush2.msra.mxu0 0.0
  %1207 = vmatprep.subr.mxu0 0.0
  %1208 = vmatpush2.msra.mxu0 0.0
  %1209 = vmatprep.subr.mxu0 0.0
  %1210 = vmatpush2.msra.mxu0 0.0
  %1211 = vmatprep.mubr.f32.mxu0 0.0
  %1212 = vmatmul.mubr.f32.gmra.mxu0 %v1145
  %v1213 = vpop.f32.mrf.mxu0
  %v1214 = vadd.f32 0.0, %v1213
  %v1215 = vpop.f32.mrf.mxu0
  %1216 = vdwg.mxu0
  %v1217 = vadd.f32 %v274, %v1214
  %v1218 = vmax.f32 %v1217, 0.0
  %v1219 = vld [vmem:[%s9] sm:$0xff]
  %v1220 = vld [vmem:[%s9 + $0x8] sm:$0xff]
  %v1221 = vld [vmem:[%s9 + $0x10] sm:$0xff]
  %v1222 = vld [vmem:[%s9 + $0x18] sm:$0xff]
  %v1223 = vld [vmem:[%s9 + $0x20] sm:$0xff]
  %v1224 = vld [vmem:[%s9 + $0x28] sm:$0xff]
  %v1225 = vld [vmem:[%s9 + $0x30] sm:$0xff]
  %v1226 = vld [vmem:[%s9 + $0x38] sm:$0xff]
  %v1227 = vld [vmem:[%s10] sm:$0x1]
  %v1229 = vlaneseq
  %v1230 = vshrl.u32 %v1229, 7
  %v1231 = vsub.s32 0, %v1230
  %v1232 = vrot.slane %v1227, %v1231
  %vm1234 = vcmask 523264
  %v1236 = vsel %vm1234, %v1218, 0
  %1238 = vmatprep.subr.mxu0 0.0
  %1239 = vmatpush1.msra.mxu0 0.0
  %1240 = vmatprep.subr.mxu0 0.0
  %1241 = vmatpush1.msra.mxu0 0.0
  %1242 = vmatprep.subr.mxu0 0.0
  %1243 = vmatpush1.msra.mxu0 0.0
  %1244 = vmatprep.subr.mxu0 0.0
  %1245 = vmatpush1.msra.mxu0 0.0
  %1246 = vmatprep.subr.mxu0 0.0
  %1247 = vmatpush1.msra.mxu0 0.0
  %1248 = vmatprep.subr.mxu0 0.0
  %1249 = vmatpush1.msra.mxu0 0.0
  %1250 = vmatprep.subr.mxu0 0.0
  %1251 = vmatpush1.msra.mxu0 0.0
  %1252 = vmatprep.subr.mxu0 0.0
  %1253 = vmatpush1.msra.mxu0 0.0
  %1254 = vmatprep.subr.mxu0 0.0
  %1255 = vmatpush1.msra.mxu0 %v1226
  %1256 = vmatprep.subr.mxu0 0.0
  %1257 = vmatpush1.msra.mxu0 %v1225
  %1258 = vmatprep.subr.mxu0 0.0
  %1259 = vmatpush1.msra.mxu0 %v1224
  %1260 = vmatprep.subr.mxu0 0.0
  %1261 = vmatpush1.msra.mxu0 %v1223
  %1262 = vmatprep.subr.mxu0 0.0
  %1263 = vmatpush1.msra.mxu0 %v1222
  %1264 = vmatprep.subr.mxu0 0.0
  %1265 = vmatpush1.msra.mxu0 %v1221
  %1266 = vmatprep.subr.mxu0 0.0
  %1267 = vmatpush1.msra.mxu0 %v1220
  %1268 = vmatprep.subr.mxu0 0.0
  %1269 = vmatpush1.msra.mxu0 %v1219
  %1270 = vmatprep.subr.mxu0 0.0
  %1271 = vmatpush2.msra.mxu0 0.0
  %1272 = vmatprep.subr.mxu0 0.0
  %1273 = vmatpush2.msra.mxu0 0.0
  %1274 = vmatprep.subr.mxu0 0.0
  %1275 = vmatpush2.msra.mxu0 0.0
  %1276 = vmatprep.subr.mxu0 0.0
  %1277 = vmatpush2.msra.mxu0 0.0
  %1278 = vmatprep.subr.mxu0 0.0
  %1279 = vmatpush2.msra.mxu0 0.0
  %1280 = vmatprep.subr.mxu0 0.0
  %1281 = vmatpush2.msra.mxu0 0.0
  %1282 = vmatprep.subr.mxu0 0.0
  %1283 = vmatpush2.msra.mxu0 0.0
  %1284 = vmatprep.subr.mxu0 0.0
  %1285 = vmatpush2.msra.mxu0 0.0
  %1286 = vmatprep.subr.mxu0 0.0
  %1287 = vmatpush2.msra.mxu0 0.0
  %1288 = vmatprep.subr.mxu0 0.0
  %1289 = vmatpush2.msra.mxu0 0.0
  %1290 = vmatprep.subr.mxu0 0.0
  %1291 = vmatpush2.msra.mxu0 0.0
  %1292 = vmatprep.subr.mxu0 0.0
  %1293 = vmatpush2.msra.mxu0 0.0
  %1294 = vmatprep.subr.mxu0 0.0
  %1295 = vmatpush2.msra.mxu0 0.0
  %1296 = vmatprep.subr.mxu0 0.0
  %1297 = vmatpush2.msra.mxu0 0.0
  %1298 = vmatprep.subr.mxu0 0.0
  %1299 = vmatpush2.msra.mxu0 0.0
  %1300 = vmatprep.subr.mxu0 0.0
  %1301 = vmatpush2.msra.mxu0 0.0
  %1302 = vmatprep.mubr.f32.mxu0 0.0
  %1303 = vmatmul.mubr.f32.gmra.mxu0 %v1236
  %v1304 = vpop.f32.mrf.mxu0
  %v1305 = vadd.f32 %v1232, %v1304
  %v1306 = vpop.f32.mrf.mxu0
  %1307 = vdwg.mxu0
  %1308 = vst [vmem:[%s11] sm:$0xff] %v1305
  // Predicated region
  $region46: #{oracle_forward.1} parent=0 // pred_check
    _
  $region47: #{oracle_forward.1} parent=0 // pred_check_branch
    %1310 = sbr.rel (0) target = $region49
  $region48: #{oracle_forward.1} parent=0 // pred_region
    _
  $region49: #{oracle_forward.1} parent=0 // pred_fallthru
    _
  // Predicated region
  $region50: #{oracle_forward.1} parent=0 // pred_check
    _
  $region51: #{oracle_forward.1} parent=0 // pred_check_branch
    %1312 = sbr.rel (0) target = $region53
  $region52: #{oracle_forward.1} parent=0 // pred_region
    _
  $region53: #{oracle_forward.1} parent=0 // pred_fallthru
    _

</llo_original>
